<compile_context>
chip_gen: v7x
topology: tpu7x:2x2x1
jax: 0.10.0
libtpu: 0.0.40
codegen_flags: <defaults>
</compile_context>

<pallas_src>
import functools
import math

import jax
import jax.numpy as jnp
from jax.experimental import pallas as pl
from jax.experimental.pallas import tpu as pltpu

EPS = 1e-6


# ----------------------------------------------------------------------------
# helpers
# ----------------------------------------------------------------------------
def _pick_seq_tile(S, cap=512):
    """Largest tile (multiple of 8, <= cap) that divides S."""
    for c in (512, 256, 128, 64, 32, 16, 8):
        if c <= cap and c <= S and S % c == 0:
            return c
    return S


def _pick_tq(S):
    # Keep the (TQ, S) f32 score/exp temporaries under ~8 MiB (v7x headroom),
    # while preferring the largest tile (>=256 fills the v6e/v7x MXU M dim).
    cap = max(8, (8 * 2 ** 20) // max(1, 3 * 4 * S))
    return _pick_seq_tile(S, cap=min(512, cap))


def _vmem_limit(needed_bytes):
    """Clamp the requested scoped-VMEM budget to the physical per-core VMEM."""
    try:
        cap = int(pltpu.get_tpu_info().vmem_capacity_bytes)
    except Exception:              # pragma: no cover - conservative fallback
        cap = 64 * 2 ** 20         # v7x per-TensorCore VMEM (most restrictive)
    return int(max(32 * 2 ** 20, min(cap - 8 * 2 ** 20, needed_bytes)))


def _layer_norm(t, g, b, d, approx):
    # torch: mean(-1), std(-1) (unbiased, ddof=1); eps added to the std.
    mean = jnp.mean(t, axis=-1, keepdims=True)
    var = jnp.sum((t - mean) ** 2, axis=-1, keepdims=True) / (d - 1)
    inv = pl.reciprocal(jnp.sqrt(var) + EPS, approx=approx)
    return g * (t - mean) * inv + b


# ----------------------------------------------------------------------------
# kernel 1: LN1 + Q/K/V projection (head-major output)
# ----------------------------------------------------------------------------
def _qkv_proj_kernel(x_ref, wq_ref, bq_ref, wk_ref, bk_ref, wv_ref, bv_ref,
                     ln1_g_ref, ln1_b_ref,
                     q_ref, k_ref, v_ref,
                     *, D, H, DK, mxu_dtype, approx):
    xn = _layer_norm(x_ref[...], ln1_g_ref[...], ln1_b_ref[...], D, approx)
    xn = xn.astype(mxu_dtype)
    # NOTE: 1/sqrt(d_k) is already folded into wq / bq by the wrapper.
    q = jnp.dot(xn, wq_ref[...], preferred_element_type=jnp.float32) + bq_ref[...]
    k = jnp.dot(xn, wk_ref[...], preferred_element_type=jnp.float32) + bk_ref[...]
    v = jnp.dot(xn, wv_ref[...], preferred_element_type=jnp.float32) + bv_ref[...]
    # Head-major relayout paid ONCE per (batch, seq-tile), so the attention
    # kernel reads contiguous (S, DK) per-head tiles with no lane slicing.
    # TODO(synk): for production D/H, keep DK a multiple of 128 (or pack two
    # heads per 128-lane slab) so these per-head tiles are lane-dense.
    for h in range(H):
        sl = slice(h * DK, (h + 1) * DK)
        q_ref[h] = q[:, sl].astype(mxu_dtype)
        k_ref[h] = k[:, sl].astype(mxu_dtype)
        v_ref[h] = v[:, sl].astype(mxu_dtype)


# ----------------------------------------------------------------------------
# kernel 2: attention + output projection + residual + LN2 + FFN + residual
# ----------------------------------------------------------------------------
def _attn_ffn_kernel(x_ref, q_ref, k_ref, v_ref, mask_ref,
                     wo_ref, bo_ref, ln2_g_ref, ln2_b_ref,
                     w1_ref, b1_ref, w2_ref, b2_ref,
                     out_ref, acc_ref,
                     *, D, H, DK, mxu_dtype, approx):
    x = x_ref[...]                                       # (TQ, D) f32 residual

    # (1, S) additive mask bias; the broadcast over query rows happens inside
    # the add (sublane broadcast) — no materialized (TQ, S) temporary.
    mask_bias = jnp.where(mask_ref[...] == 0.0,
                          jnp.float32(-1e9), jnp.float32(0.0))

    # ---------------- sublayer 0 : multi-head self-attention ----------------
    # TODO(synk): for very large S on v7x, tile the KV axis flash-style
    # (online softmax) instead of holding the full (TQ, S) score tile.
    for h in range(H):                                   # static head loop
        qh = q_ref[h]                                    # (TQ, DK) mxu_dtype
        kh = k_ref[h]                                    # (S,  DK) mxu_dtype
        vh = v_ref[h]                                    # (S,  DK) mxu_dtype
        scores = jax.lax.dot_general(
            qh, kh, (((1,), (1,)), ((), ())),
            preferred_element_type=jnp.float32)          # (TQ, S) f32
        scores = scores + mask_bias
        m = jnp.max(scores, axis=-1, keepdims=True)
        p = jnp.exp(scores - m)                          # f32 softmax numerator
        denom = jnp.sum(p, axis=-1, keepdims=True)
        ho = jnp.dot(p.astype(mxu_dtype), vh,
                     preferred_element_type=jnp.float32)  # (TQ, DK)
        # Deferred softmax normalization on the small head output; slice-write
        # into the accumulator so per-head temporaries die here (no concat).
        acc_ref[:, h * DK:(h + 1) * DK] = (
            ho * pl.reciprocal(denom, approx=approx)).astype(mxu_dtype)

    # single full-width output projection (K = D keeps the MXU full)
    attn = jnp.dot(acc_ref[...], wo_ref[...],
                   preferred_element_type=jnp.float32) + bo_ref[...]
    # TODO(synk): dropout on the sublayer outputs is identity (inference mode).
    x = x + attn

    # ---------------- sublayer 1 : position-wise feed-forward ---------------
    xn2 = _layer_norm(x, ln2_g_ref[...], ln2_b_ref[...], D, approx)
    hid = jnp.dot(xn2.astype(mxu_dtype), w1_ref[...],
                  preferred_element_type=jnp.float32) + b1_ref[...]
    hid = jnp.maximum(hid, 0.0)
    ff = jnp.dot(hid.astype(mxu_dtype), w2_ref[...],
                 preferred_element_type=jnp.float32) + b2_ref[...]
    out_ref[...] = (x + ff).astype(out_ref.dtype)


# ----------------------------------------------------------------------------
# wrapper
# ----------------------------------------------------------------------------
def encoder_layer(x, mask, params, *, num_heads, mxu_dtype=jnp.bfloat16):
    B, S, D = x.shape
    DFF = params['w1'].shape[1]
    H = num_heads
    DK = D // H
    TS = _pick_seq_tile(S)
    TQ = _pick_tq(S)
    NQ = S // TQ
    mxu_dtype = jnp.dtype(mxu_dtype)
    mxu_itemsize = mxu_dtype.itemsize
    # approx (EUP) reciprocals only on the performance path; f32 path is exact.
    approx = (mxu_dtype != jnp.dtype(jnp.float32))

    def cast_w(a):
        return a if a.dtype == mxu_dtype else a.astype(mxu_dtype)

    # fold 1/sqrt(d_k) into the Q projection once (removes H*TQ*S per-step
    # VPU multiplies from the attention inner loop)
    scale = 1.0 / math.sqrt(DK)
    wq = cast_w(params['wq'] * scale)
    bq = params['bq'] * scale
    wk, bk = cast_w(params['wk']), params['bk']
    wv, bv = cast_w(params['wv']), params['bv']
    wo, bo = cast_w(params['wo']), params['bo']
    w1, b1 = cast_w(params['w1']), params['b1']
    w2, b2 = cast_w(params['w2']), params['b2']
    ln1_g, ln1_b = params['ln1_g'], params['ln1_b']
    ln2_g, ln2_b = params['ln2_g'], params['ln2_b']

    qkv_weights = [wq, bq, wk, bk, wv, bv, ln1_g, ln1_b]
    attn_weights = [wo, bo, ln2_g, ln2_b, w1, b1, w2, b2]

    def const_spec(a, pipeline_mode):
        # Grid-invariant operand: same block every step. Buffered(1) drops the
        # pointless second buffer (halves resident weight VMEM).
        nd = a.ndim
        if pipeline_mode is None:
            return pl.BlockSpec(a.shape, lambda b, s, _nd=nd: (0,) * _nd)
        return pl.BlockSpec(a.shape, lambda b, s, _nd=nd: (0,) * _nd,
                            pipeline_mode=pipeline_mode)

    # ------------------ kernel 1 : LN1 + Q/K/V projection -------------------
    qkv_w_bytes = sum(int(a.size) * a.dtype.itemsize for a in qkv_weights)
    qkv_needed = (2 * qkv_w_bytes
                  + 2 * (TS * D * 4 + 3 * H * TS * DK * mxu_itemsize)
                  + (8 << 20))
    qkv_cost = pl.CostEstimate(
        flops=int(2 * B * S * 3 * D * D),
        transcendentals=int(B * S),
        bytes_accessed=int(x.size * x.dtype.itemsize
                           + 3 * B * S * D * mxu_itemsize + qkv_w_bytes))

    def run_qkv(weight_mode):
        kern = functools.partial(_qkv_proj_kernel, D=D, H=H, DK=DK,
                                 mxu_dtype=mxu_dtype, approx=approx)
        return pl.pallas_call(
            kern,
            out_shape=tuple(jax.ShapeDtypeStruct((B, H, S, DK), mxu_dtype)
                            for _ in range(3)),
            grid=(B, S // TS),
            in_specs=([pl.BlockSpec((None, TS, D), lambda b, s: (b, s, 0))]
                      + [const_spec(a, weight_mode) for a in qkv_weights]),
            out_specs=tuple(pl.BlockSpec((None, H, TS, DK),
                                         lambda b, s: (b, 0, s, 0))
                            for _ in range(3)),
            compiler_params=pltpu.CompilerParams(
                dimension_semantics=("parallel", "parallel"),
                vmem_limit_bytes=_vmem_limit(qkv_needed)),
            cost_estimate=qkv_cost,
        )(x, *qkv_weights)

    try:
        q, k, v = run_qkv(pl.Buffered(1))
    except Exception:   # pl.Buffered(1) unsupported in this jax build
        q, k, v = run_qkv(None)

    # -------- kernel 2 : attention + wo + residual + LN2 + FFN + residual ---
    attn_w_bytes = sum(int(a.size) * a.dtype.itemsize for a in attn_weights)
    attn_needed = (2 * attn_w_bytes
                   + 2 * (2 * TQ * D * 4                  # x tile + out tile
                          + TQ * D * mxu_itemsize          # q tile
                          + 2 * S * D * mxu_itemsize       # k + v (full seq)
                          + S * 4)                         # mask row
                   + TQ * D * mxu_itemsize                 # acc scratch
                   + 3 * TQ * S * 4                        # score/exp temps
                   + (8 << 20))
    attn_cost = pl.CostEstimate(
        flops=int(B * (4 * S * S * D + 2 * S * D * D + 4 * S * D * DFF)),
        transcendentals=int(B * H * S * S),
        bytes_accessed=int(2 * x.size * x.dtype.itemsize
                           + 3 * B * S * D * mxu_itemsize
                           + mask.size * mask.dtype.itemsize + attn_w_bytes))

    def run_attn(weight_mode):
        kern = functools.partial(_attn_ffn_kernel, D=D, H=H, DK=DK,
                                 mxu_dtype=mxu_dtype, approx=approx)
        return pl.pallas_call(
            kern,
            out_shape=jax.ShapeDtypeStruct((B, S, D), x.dtype),
            grid=(B, NQ),
            in_specs=([pl.BlockSpec((None, TQ, D), lambda b, s: (b, s, 0)),
                       pl.BlockSpec((None, H, TQ, DK), lambda b, s: (b, 0, s, 0)),
                       pl.BlockSpec((None, H, S, DK), lambda b, s: (b, 0, 0, 0)),
                       pl.BlockSpec((None, H, S, DK), lambda b, s: (b, 0, 0, 0)),
                       pl.BlockSpec((None, 1, S), lambda b, s: (b, 0, 0))]
                      + [const_spec(a, weight_mode) for a in attn_weights]),
            out_specs=pl.BlockSpec((None, TQ, D), lambda b, s: (b, s, 0)),
            scratch_shapes=[pltpu.VMEM((TQ, D), mxu_dtype)],
            compiler_params=pltpu.CompilerParams(
                dimension_semantics=("parallel", "parallel"),
                vmem_limit_bytes=_vmem_limit(attn_needed)),
            cost_estimate=attn_cost,
        )(x, q, k, v, mask, *attn_weights)

    try:
        return run_attn(pl.Buffered(1))
    except Exception:   # pl.Buffered(1) unsupported in this jax build
        return run_attn(None)


# ----------------------------------------------------------------------------
# pure-JAX reference (mirror of the PyTorch forward) for verification
# ----------------------------------------------------------------------------
def reference(x, mask, p, *, num_heads):
    B, S, D = x.shape
    DK = D // num_heads

    def ln(v, g, b):
        mean = v.mean(-1, keepdims=True)
        var = ((v - mean) ** 2).sum(-1, keepdims=True) / (D - 1)
        return g * (v - mean) / (jnp.sqrt(var) + EPS) + b

    xn = ln(x, p['ln1_g'], p['ln1_b'])
    q = xn @ p['wq'] + p['bq']
    k = xn @ p['wk'] + p['bk']
    v = xn @ p['wv'] + p['bv']
    qh = q.reshape(B, S, num_heads, DK).transpose(0, 2, 1, 3)
    kh = k.reshape(B, S, num_heads, DK).transpose(0, 2, 1, 3)
    vh = v.reshape(B, S, num_heads, DK).transpose(0, 2, 1, 3)
    scores = jnp.einsum('bhqd,bhkd->bhqk', qh, kh) / math.sqrt(DK)
    scores = jnp.where(mask[:, None, :, :] == 0.0, -1e9, scores)
    attn = jax.nn.softmax(scores, axis=-1)
    o = jnp.einsum('bhqk,bhkd->bhqd', attn, vh).transpose(0, 2, 1, 3).reshape(B, S, D)
    o = o @ p['wo'] + p['bo']
    x = x + o
    xn = ln(x, p['ln2_g'], p['ln2_b'])
    ff = jnp.maximum(xn @ p['w1'] + p['b1'], 0.0) @ p['w2'] + p['b2']
    return x + ff


if __name__ == "__main__":
    B, S, D, H, DFF = 2, 8, 32, 4, 64

    key = jax.random.PRNGKey(0)
    ks = jax.random.split(key, 8)
    init = lambda k, shape: (0.02 * jax.random.normal(k, shape, jnp.float32))

    params = {
        'wq': init(ks[0], (D, D)),   'bq': jnp.zeros((1, D), jnp.float32),
        'wk': init(ks[1], (D, D)),   'bk': jnp.zeros((1, D), jnp.float32),
        'wv': init(ks[2], (D, D)),   'bv': jnp.zeros((1, D), jnp.float32),
        'wo': init(ks[3], (D, D)),   'bo': jnp.zeros((1, D), jnp.float32),
        'ln1_g': jnp.ones((1, D), jnp.float32), 'ln1_b': jnp.zeros((1, D), jnp.float32),
        'ln2_g': jnp.ones((1, D), jnp.float32), 'ln2_b': jnp.zeros((1, D), jnp.float32),
        'w1': init(ks[4], (D, DFF)), 'b1': jnp.zeros((1, DFF), jnp.float32),
        'w2': init(ks[5], (DFF, D)), 'b2': jnp.zeros((1, D), jnp.float32),
    }

    x = jax.random.normal(ks[6], (B, S, D), jnp.float32)
    # mask: batch 0 fully visible, batch 1 has last two positions masked out
    mask = jnp.ones((B, 1, S), jnp.float32).at[1, 0, S - 2:].set(0.0)

    ref = reference(x, mask, params, num_heads=H)

    # Full-precision MXU path (exact reciprocals): tight semantic check.
    out_f32 = encoder_layer(x, mask, params, num_heads=H, mxu_dtype=jnp.float32)
    jax.block_until_ready(out_f32)
    assert out_f32.shape == (B, S, D)
    assert jnp.allclose(out_f32, ref, atol=2e-3, rtol=2e-3), "f32 kernel != reference"

    # Default (performance) path: bf16 MXU operands, f32 accumulation/softmax.
    out_bf16 = encoder_layer(x, mask, params, num_heads=H)
    jax.block_until_ready(out_bf16)
    assert out_bf16.shape == (B, S, D)
    assert jnp.allclose(out_bf16, ref, atol=2e-2, rtol=2e-2), "bf16 kernel != reference"

    print("KERNEL_OK")
</pallas_src>

<mosaic_0001>
module attributes {stable_mosaic.version = 11 : i64} {
  func.func @_qkv_proj_kernel(%arg0: i32, %arg1: i32, %arg2: memref<1x8x32xf32, #tpu.memory_space<vmem>>, %arg3: memref<32x32xf32, #tpu.memory_space<vmem>>, %arg4: memref<1x32xf32, #tpu.memory_space<vmem>>, %arg5: memref<32x32xf32, #tpu.memory_space<vmem>>, %arg6: memref<1x32xf32, #tpu.memory_space<vmem>>, %arg7: memref<32x32xf32, #tpu.memory_space<vmem>>, %arg8: memref<1x32xf32, #tpu.memory_space<vmem>>, %arg9: memref<1x32xf32, #tpu.memory_space<vmem>>, %arg10: memref<1x32xf32, #tpu.memory_space<vmem>>, %arg11: memref<1x4x8x8xf32, #tpu.memory_space<vmem>>, %arg12: memref<1x4x8x8xf32, #tpu.memory_space<vmem>>, %arg13: memref<1x4x8x8xf32, #tpu.memory_space<vmem>>) attributes {dimension_semantics = [#tpu.dimension_semantics<parallel>, #tpu.dimension_semantics<parallel>], iteration_bounds = array<i64: 2, 1>, scalar_prefetch = 0 : i64, scratch_operands = 0 : i64, tpu.core_type = #tpu.core_type<tc>, window_params = [{transform_indices = @transform_0, window_bounds = array<i64: 1, 8, 32>}, {pipeline_mode = #tpu.pipeline_mode<synchronous>, transform_indices = @transform_1, window_bounds = array<i64: 32, 32>}, {pipeline_mode = #tpu.pipeline_mode<synchronous>, transform_indices = @transform_2, window_bounds = array<i64: 1, 32>}, {pipeline_mode = #tpu.pipeline_mode<synchronous>, transform_indices = @transform_3, window_bounds = array<i64: 32, 32>}, {pipeline_mode = #tpu.pipeline_mode<synchronous>, transform_indices = @transform_4, window_bounds = array<i64: 1, 32>}, {pipeline_mode = #tpu.pipeline_mode<synchronous>, transform_indices = @transform_5, window_bounds = array<i64: 32, 32>}, {pipeline_mode = #tpu.pipeline_mode<synchronous>, transform_indices = @transform_6, window_bounds = array<i64: 1, 32>}, {pipeline_mode = #tpu.pipeline_mode<synchronous>, transform_indices = @transform_7, window_bounds = array<i64: 1, 32>}, {pipeline_mode = #tpu.pipeline_mode<synchronous>, transform_indices = @transform_8, window_bounds = array<i64: 1, 32>}, {transform_indices = @transform_9, window_bounds = array<i64: 1, 4, 8, 8>}, {transform_indices = @transform_10, window_bounds = array<i64: 1, 4, 8, 8>}, {transform_indices = @transform_11, window_bounds = array<i64: 1, 4, 8, 8>}]} {
    %c0 = arith.constant 0 : index
    %c0_0 = arith.constant 0 : index
    %c0_1 = arith.constant 0 : index
    %0 = vector.load %arg2[%c0, %c0_0, %c0_1] : memref<1x8x32xf32, #tpu.memory_space<vmem>>, vector<1x8x32xf32>
    %1 = vector.shape_cast %0 : vector<1x8x32xf32> to vector<8x32xf32>
    %c0_2 = arith.constant 0 : index
    %c0_3 = arith.constant 0 : index
    %2 = vector.load %arg9[%c0_2, %c0_3] : memref<1x32xf32, #tpu.memory_space<vmem>>, vector<1x32xf32>
    %c0_4 = arith.constant 0 : index
    %c0_5 = arith.constant 0 : index
    %3 = vector.load %arg10[%c0_4, %c0_5] : memref<1x32xf32, #tpu.memory_space<vmem>>, vector<1x32xf32>
    %cst = arith.constant dense<0.000000e+00> : vector<8xf32>
    %4 = vector.multi_reduction <add>, %1, %cst [1] : vector<8x32xf32> to vector<8xf32>
    %5 = vector.shape_cast %4 : vector<8xf32> to vector<8x1xf32>
    %cst_6 = arith.constant 3.200000e+01 : f32
    %6 = vector.broadcast %cst_6 : f32 to vector<8x1xf32>
    %7 = arith.divf %5, %6 : vector<8x1xf32>
    %8 = vector.broadcast %7 : vector<8x1xf32> to vector<8x32xf32>
    %9 = arith.subf %1, %8 : vector<8x32xf32>
    %10 = arith.mulf %9, %9 : vector<8x32xf32>
    %cst_7 = arith.constant dense<0.000000e+00> : vector<8xf32>
    %11 = vector.multi_reduction <add>, %10, %cst_7 [1] : vector<8x32xf32> to vector<8xf32>
    %12 = vector.shape_cast %11 : vector<8xf32> to vector<8x1xf32>
    %cst_8 = arith.constant 3.100000e+01 : f32
    %13 = vector.broadcast %cst_8 : f32 to vector<8x1xf32>
    %14 = arith.divf %12, %13 : vector<8x1xf32>
    %15 = math.sqrt %14 : vector<8x1xf32>
    %cst_9 = arith.constant 9.99999997E-7 : f32
    %16 = vector.broadcast %cst_9 : f32 to vector<8x1xf32>
    %17 = arith.addf %15, %16 : vector<8x1xf32>
    %18 = tpu.reciprocal %17 : vector<8x1xf32> -> vector<8x1xf32>
    %19 = vector.broadcast %7 : vector<8x1xf32> to vector<8x32xf32>
    %20 = arith.subf %1, %19 : vector<8x32xf32>
    %21 = vector.broadcast %2 : vector<1x32xf32> to vector<8x32xf32>
    %22 = arith.mulf %21, %20 : vector<8x32xf32>
    %23 = vector.broadcast %18 : vector<8x1xf32> to vector<8x32xf32>
    %24 = arith.mulf %22, %23 : vector<8x32xf32>
    %25 = vector.broadcast %3 : vector<1x32xf32> to vector<8x32xf32>
    %26 = arith.addf %24, %25 : vector<8x32xf32>
    %c0_10 = arith.constant 0 : index
    %c0_11 = arith.constant 0 : index
    %27 = vector.load %arg3[%c0_10, %c0_11] : memref<32x32xf32, #tpu.memory_space<vmem>>, vector<32x32xf32>
    %cst_12 = arith.constant dense<0.000000e+00> : vector<8x32xf32>
    %28 = tpu.matmul %26, %27, %cst_12 {dimension_numbers = #tpu.dot_dimension_numbers<[1], [0], [0], [1], [0, 0, 1, 1], [], []>} : vector<8x32xf32>, vector<32x32xf32>, vector<8x32xf32> -> vector<8x32xf32>
    %c0_13 = arith.constant 0 : index
    %c0_14 = arith.constant 0 : index
    %29 = vector.load %arg4[%c0_13, %c0_14] : memref<1x32xf32, #tpu.memory_space<vmem>>, vector<1x32xf32>
    %30 = vector.broadcast %29 : vector<1x32xf32> to vector<8x32xf32>
    %31 = arith.addf %28, %30 : vector<8x32xf32>
    %c0_15 = arith.constant 0 : index
    %c0_16 = arith.constant 0 : index
    %32 = vector.load %arg5[%c0_15, %c0_16] : memref<32x32xf32, #tpu.memory_space<vmem>>, vector<32x32xf32>
    %cst_17 = arith.constant dense<0.000000e+00> : vector<8x32xf32>
    %33 = tpu.matmul %26, %32, %cst_17 {dimension_numbers = #tpu.dot_dimension_numbers<[1], [0], [0], [1], [0, 0, 1, 1], [], []>} : vector<8x32xf32>, vector<32x32xf32>, vector<8x32xf32> -> vector<8x32xf32>
    %c0_18 = arith.constant 0 : index
    %c0_19 = arith.constant 0 : index
    %34 = vector.load %arg6[%c0_18, %c0_19] : memref<1x32xf32, #tpu.memory_space<vmem>>, vector<1x32xf32>
    %35 = vector.broadcast %34 : vector<1x32xf32> to vector<8x32xf32>
    %36 = arith.addf %33, %35 : vector<8x32xf32>
    %c0_20 = arith.constant 0 : index
    %c0_21 = arith.constant 0 : index
    %37 = vector.load %arg7[%c0_20, %c0_21] : memref<32x32xf32, #tpu.memory_space<vmem>>, vector<32x32xf32>
    %cst_22 = arith.constant dense<0.000000e+00> : vector<8x32xf32>
    %38 = tpu.matmul %26, %37, %cst_22 {dimension_numbers = #tpu.dot_dimension_numbers<[1], [0], [0], [1], [0, 0, 1, 1], [], []>} : vector<8x32xf32>, vector<32x32xf32>, vector<8x32xf32> -> vector<8x32xf32>
    %c0_23 = arith.constant 0 : index
    %c0_24 = arith.constant 0 : index
    %39 = vector.load %arg8[%c0_23, %c0_24] : memref<1x32xf32, #tpu.memory_space<vmem>>, vector<1x32xf32>
    %40 = vector.broadcast %39 : vector<1x32xf32> to vector<8x32xf32>
    %41 = arith.addf %38, %40 : vector<8x32xf32>
    %42 = vector.extract_strided_slice %31 {offsets = [0, 0], sizes = [8, 8], strides = [1, 1]} : vector<8x32xf32> to vector<8x8xf32>
    %c0_25 = arith.constant 0 : index
    %c0_26 = arith.constant 0 : index
    %c0_27 = arith.constant 0 : index
    %c0_28 = arith.constant 0 : index
    %43 = vector.load %arg11[%c0_25, %c0_26, %c0_27, %c0_28] : memref<1x4x8x8xf32, #tpu.memory_space<vmem>>, vector<1x1x8x8xf32>
    %44 = vector.shape_cast %43 : vector<1x1x8x8xf32> to vector<8x8xf32>
    %45 = vector.shape_cast %42 : vector<8x8xf32> to vector<1x1x8x8xf32>
    tpu.vector_store %arg11[%c0_25, %c0_26, %c0_27, %c0_28], %45 {strides = array<i32>} : memref<1x4x8x8xf32, #tpu.memory_space<vmem>>, vector<1x1x8x8xf32>,
    %46 = vector.extract_strided_slice %36 {offsets = [0, 0], sizes = [8, 8], strides = [1, 1]} : vector<8x32xf32> to vector<8x8xf32>
    %c0_29 = arith.constant 0 : index
    %c0_30 = arith.constant 0 : index
    %c0_31 = arith.constant 0 : index
    %c0_32 = arith.constant 0 : index
    %47 = vector.load %arg12[%c0_29, %c0_30, %c0_31, %c0_32] : memref<1x4x8x8xf32, #tpu.memory_space<vmem>>, vector<1x1x8x8xf32>
    %48 = vector.shape_cast %47 : vector<1x1x8x8xf32> to vector<8x8xf32>
    %49 = vector.shape_cast %46 : vector<8x8xf32> to vector<1x1x8x8xf32>
    tpu.vector_store %arg12[%c0_29, %c0_30, %c0_31, %c0_32], %49 {strides = array<i32>} : memref<1x4x8x8xf32, #tpu.memory_space<vmem>>, vector<1x1x8x8xf32>,
    %50 = vector.extract_strided_slice %41 {offsets = [0, 0], sizes = [8, 8], strides = [1, 1]} : vector<8x32xf32> to vector<8x8xf32>
    %c0_33 = arith.constant 0 : index
    %c0_34 = arith.constant 0 : index
    %c0_35 = arith.constant 0 : index
    %c0_36 = arith.constant 0 : index
    %51 = vector.load %arg13[%c0_33, %c0_34, %c0_35, %c0_36] : memref<1x4x8x8xf32, #tpu.memory_space<vmem>>, vector<1x1x8x8xf32>
    %52 = vector.shape_cast %51 : vector<1x1x8x8xf32> to vector<8x8xf32>
    %53 = vector.shape_cast %50 : vector<8x8xf32> to vector<1x1x8x8xf32>
    tpu.vector_store %arg13[%c0_33, %c0_34, %c0_35, %c0_36], %53 {strides = array<i32>} : memref<1x4x8x8xf32, #tpu.memory_space<vmem>>, vector<1x1x8x8xf32>,
    %54 = vector.extract_strided_slice %31 {offsets = [0, 8], sizes = [8, 8], strides = [1, 1]} : vector<8x32xf32> to vector<8x8xf32>
    %c0_37 = arith.constant 0 : index
    %c1 = arith.constant 1 : index
    %c0_38 = arith.constant 0 : index
    %c0_39 = arith.constant 0 : index
    %55 = vector.load %arg11[%c0_37, %c1, %c0_38, %c0_39] : memref<1x4x8x8xf32, #tpu.memory_space<vmem>>, vector<1x1x8x8xf32>
    %56 = vector.shape_cast %55 : vector<1x1x8x8xf32> to vector<8x8xf32>
    %57 = vector.shape_cast %54 : vector<8x8xf32> to vector<1x1x8x8xf32>
    tpu.vector_store %arg11[%c0_37, %c1, %c0_38, %c0_39], %57 {strides = array<i32>} : memref<1x4x8x8xf32, #tpu.memory_space<vmem>>, vector<1x1x8x8xf32>,
    %58 = vector.extract_strided_slice %36 {offsets = [0, 8], sizes = [8, 8], strides = [1, 1]} : vector<8x32xf32> to vector<8x8xf32>
    %c0_40 = arith.constant 0 : index
    %c1_41 = arith.constant 1 : index
    %c0_42 = arith.constant 0 : index
    %c0_43 = arith.constant 0 : index
    %59 = vector.load %arg12[%c0_40, %c1_41, %c0_42, %c0_43] : memref<1x4x8x8xf32, #tpu.memory_space<vmem>>, vector<1x1x8x8xf32>
    %60 = vector.shape_cast %59 : vector<1x1x8x8xf32> to vector<8x8xf32>
    %61 = vector.shape_cast %58 : vector<8x8xf32> to vector<1x1x8x8xf32>
    tpu.vector_store %arg12[%c0_40, %c1_41, %c0_42, %c0_43], %61 {strides = array<i32>} : memref<1x4x8x8xf32, #tpu.memory_space<vmem>>, vector<1x1x8x8xf32>,
    %62 = vector.extract_strided_slice %41 {offsets = [0, 8], sizes = [8, 8], strides = [1, 1]} : vector<8x32xf32> to vector<8x8xf32>
    %c0_44 = arith.constant 0 : index
    %c1_45 = arith.constant 1 : index
    %c0_46 = arith.constant 0 : index
    %c0_47 = arith.constant 0 : index
    %63 = vector.load %arg13[%c0_44, %c1_45, %c0_46, %c0_47] : memref<1x4x8x8xf32, #tpu.memory_space<vmem>>, vector<1x1x8x8xf32>
    %64 = vector.shape_cast %63 : vector<1x1x8x8xf32> to vector<8x8xf32>
    %65 = vector.shape_cast %62 : vector<8x8xf32> to vector<1x1x8x8xf32>
    tpu.vector_store %arg13[%c0_44, %c1_45, %c0_46, %c0_47], %65 {strides = array<i32>} : memref<1x4x8x8xf32, #tpu.memory_space<vmem>>, vector<1x1x8x8xf32>,
    %66 = vector.extract_strided_slice %31 {offsets = [0, 16], sizes = [8, 8], strides = [1, 1]} : vector<8x32xf32> to vector<8x8xf32>
    %c0_48 = arith.constant 0 : index
    %c2 = arith.constant 2 : index
    %c0_49 = arith.constant 0 : index
    %c0_50 = arith.constant 0 : index
    %67 = vector.load %arg11[%c0_48, %c2, %c0_49, %c0_50] : memref<1x4x8x8xf32, #tpu.memory_space<vmem>>, vector<1x1x8x8xf32>
    %68 = vector.shape_cast %67 : vector<1x1x8x8xf32> to vector<8x8xf32>
    %69 = vector.shape_cast %66 : vector<8x8xf32> to vector<1x1x8x8xf32>
    tpu.vector_store %arg11[%c0_48, %c2, %c0_49, %c0_50], %69 {strides = array<i32>} : memref<1x4x8x8xf32, #tpu.memory_space<vmem>>, vector<1x1x8x8xf32>,
    %70 = vector.extract_strided_slice %36 {offsets = [0, 16], sizes = [8, 8], strides = [1, 1]} : vector<8x32xf32> to vector<8x8xf32>
    %c0_51 = arith.constant 0 : index
    %c2_52 = arith.constant 2 : index
    %c0_53 = arith.constant 0 : index
    %c0_54 = arith.constant 0 : index
    %71 = vector.load %arg12[%c0_51, %c2_52, %c0_53, %c0_54] : memref<1x4x8x8xf32, #tpu.memory_space<vmem>>, vector<1x1x8x8xf32>
    %72 = vector.shape_cast %71 : vector<1x1x8x8xf32> to vector<8x8xf32>
    %73 = vector.shape_cast %70 : vector<8x8xf32> to vector<1x1x8x8xf32>
    tpu.vector_store %arg12[%c0_51, %c2_52, %c0_53, %c0_54], %73 {strides = array<i32>} : memref<1x4x8x8xf32, #tpu.memory_space<vmem>>, vector<1x1x8x8xf32>,
    %74 = vector.extract_strided_slice %41 {offsets = [0, 16], sizes = [8, 8], strides = [1, 1]} : vector<8x32xf32> to vector<8x8xf32>
    %c0_55 = arith.constant 0 : index
    %c2_56 = arith.constant 2 : index
    %c0_57 = arith.constant 0 : index
    %c0_58 = arith.constant 0 : index
    %75 = vector.load %arg13[%c0_55, %c2_56, %c0_57, %c0_58] : memref<1x4x8x8xf32, #tpu.memory_space<vmem>>, vector<1x1x8x8xf32>
    %76 = vector.shape_cast %75 : vector<1x1x8x8xf32> to vector<8x8xf32>
    %77 = vector.shape_cast %74 : vector<8x8xf32> to vector<1x1x8x8xf32>
    tpu.vector_store %arg13[%c0_55, %c2_56, %c0_57, %c0_58], %77 {strides = array<i32>} : memref<1x4x8x8xf32, #tpu.memory_space<vmem>>, vector<1x1x8x8xf32>,
    %78 = vector.extract_strided_slice %31 {offsets = [0, 24], sizes = [8, 8], strides = [1, 1]} : vector<8x32xf32> to vector<8x8xf32>
    %c0_59 = arith.constant 0 : index
    %c3 = arith.constant 3 : index
    %c0_60 = arith.constant 0 : index
    %c0_61 = arith.constant 0 : index
    %79 = vector.load %arg11[%c0_59, %c3, %c0_60, %c0_61] : memref<1x4x8x8xf32, #tpu.memory_space<vmem>>, vector<1x1x8x8xf32>
    %80 = vector.shape_cast %79 : vector<1x1x8x8xf32> to vector<8x8xf32>
    %81 = vector.shape_cast %78 : vector<8x8xf32> to vector<1x1x8x8xf32>
    tpu.vector_store %arg11[%c0_59, %c3, %c0_60, %c0_61], %81 {strides = array<i32>} : memref<1x4x8x8xf32, #tpu.memory_space<vmem>>, vector<1x1x8x8xf32>,
    %82 = vector.extract_strided_slice %36 {offsets = [0, 24], sizes = [8, 8], strides = [1, 1]} : vector<8x32xf32> to vector<8x8xf32>
    %c0_62 = arith.constant 0 : index
    %c3_63 = arith.constant 3 : index
    %c0_64 = arith.constant 0 : index
    %c0_65 = arith.constant 0 : index
    %83 = vector.load %arg12[%c0_62, %c3_63, %c0_64, %c0_65] : memref<1x4x8x8xf32, #tpu.memory_space<vmem>>, vector<1x1x8x8xf32>
    %84 = vector.shape_cast %83 : vector<1x1x8x8xf32> to vector<8x8xf32>
    %85 = vector.shape_cast %82 : vector<8x8xf32> to vector<1x1x8x8xf32>
    tpu.vector_store %arg12[%c0_62, %c3_63, %c0_64, %c0_65], %85 {strides = array<i32>} : memref<1x4x8x8xf32, #tpu.memory_space<vmem>>, vector<1x1x8x8xf32>,
    %86 = vector.extract_strided_slice %41 {offsets = [0, 24], sizes = [8, 8], strides = [1, 1]} : vector<8x32xf32> to vector<8x8xf32>
    %c0_66 = arith.constant 0 : index
    %c3_67 = arith.constant 3 : index
    %c0_68 = arith.constant 0 : index
    %c0_69 = arith.constant 0 : index
    %87 = vector.load %arg13[%c0_66, %c3_67, %c0_68, %c0_69] : memref<1x4x8x8xf32, #tpu.memory_space<vmem>>, vector<1x1x8x8xf32>
    %88 = vector.shape_cast %87 : vector<1x1x8x8xf32> to vector<8x8xf32>
    %89 = vector.shape_cast %86 : vector<8x8xf32> to vector<1x1x8x8xf32>
    tpu.vector_store %arg13[%c0_66, %c3_67, %c0_68, %c0_69], %89 {strides = array<i32>} : memref<1x4x8x8xf32, #tpu.memory_space<vmem>>, vector<1x1x8x8xf32>,
    return
  }
  func.func @transform_0(%arg0: i32, %arg1: i32) -> (i32, i32, i32) {
    %c0_i32 = arith.constant 0 : i32
    %c0_i32_0 = arith.constant 0 : i32
    return %arg0, %arg1, %c0_i32 : i32, i32, i32
  }
  func.func @transform_1(%arg0: i32, %arg1: i32) -> (i32, i32) {
    %c0_i32 = arith.constant 0 : i32
    %c0_i32_0 = arith.constant 0 : i32
    %c0_i32_1 = arith.constant 0 : i32
    return %c0_i32, %c0_i32_0 : i32, i32
  }
  func.func @transform_2(%arg0: i32, %arg1: i32) -> (i32, i32) {
    %c0_i32 = arith.constant 0 : i32
    %c0_i32_0 = arith.constant 0 : i32
    %c0_i32_1 = arith.constant 0 : i32
    return %c0_i32, %c0_i32_0 : i32, i32
  }
  func.func @transform_3(%arg0: i32, %arg1: i32) -> (i32, i32) {
    %c0_i32 = arith.constant 0 : i32
    %c0_i32_0 = arith.constant 0 : i32
    %c0_i32_1 = arith.constant 0 : i32
    return %c0_i32, %c0_i32_0 : i32, i32
  }
  func.func @transform_4(%arg0: i32, %arg1: i32) -> (i32, i32) {
    %c0_i32 = arith.constant 0 : i32
    %c0_i32_0 = arith.constant 0 : i32
    %c0_i32_1 = arith.constant 0 : i32
    return %c0_i32, %c0_i32_0 : i32, i32
  }
  func.func @transform_5(%arg0: i32, %arg1: i32) -> (i32, i32) {
    %c0_i32 = arith.constant 0 : i32
    %c0_i32_0 = arith.constant 0 : i32
    %c0_i32_1 = arith.constant 0 : i32
    return %c0_i32, %c0_i32_0 : i32, i32
  }
  func.func @transform_6(%arg0: i32, %arg1: i32) -> (i32, i32) {
    %c0_i32 = arith.constant 0 : i32
    %c0_i32_0 = arith.constant 0 : i32
    %c0_i32_1 = arith.constant 0 : i32
    return %c0_i32, %c0_i32_0 : i32, i32
  }
  func.func @transform_7(%arg0: i32, %arg1: i32) -> (i32, i32) {
    %c0_i32 = arith.constant 0 : i32
    %c0_i32_0 = arith.constant 0 : i32
    %c0_i32_1 = arith.constant 0 : i32
    return %c0_i32, %c0_i32_0 : i32, i32
  }
  func.func @transform_8(%arg0: i32, %arg1: i32) -> (i32, i32) {
    %c0_i32 = arith.constant 0 : i32
    %c0_i32_0 = arith.constant 0 : i32
    %c0_i32_1 = arith.constant 0 : i32
    return %c0_i32, %c0_i32_0 : i32, i32
  }
  func.func @transform_9(%arg0: i32, %arg1: i32) -> (i32, i32, i32, i32) {
    %c0_i32 = arith.constant 0 : i32
    %c0_i32_0 = arith.constant 0 : i32
    %c0_i32_1 = arith.constant 0 : i32
    return %arg0, %c0_i32, %arg1, %c0_i32_0 : i32, i32, i32, i32
  }
  func.func @transform_10(%arg0: i32, %arg1: i32) -> (i32, i32, i32, i32) {
    %c0_i32 = arith.constant 0 : i32
    %c0_i32_0 = arith.constant 0 : i32
    %c0_i32_1 = arith.constant 0 : i32
    return %arg0, %c0_i32, %arg1, %c0_i32_0 : i32, i32, i32, i32
  }
  func.func @transform_11(%arg0: i32, %arg1: i32) -> (i32, i32, i32, i32) {
    %c0_i32 = arith.constant 0 : i32
    %c0_i32_0 = arith.constant 0 : i32
    %c0_i32_1 = arith.constant 0 : i32
    return %arg0, %c0_i32, %arg1, %c0_i32_0 : i32, i32, i32, i32
  }
}

module attributes {stable_mosaic.version = 11 : i64} {
  func.func @_qkv_proj_kernel(%arg0: i32, %arg1: i32, %arg2: memref<1x8x32xf32, #tpu.memory_space<vmem>>, %arg3: memref<32x32xf32, #tpu.memory_space<vmem>>, %arg4: memref<1x32xf32, #tpu.memory_space<vmem>>, %arg5: memref<32x32xf32, #tpu.memory_space<vmem>>, %arg6: memref<1x32xf32, #tpu.memory_space<vmem>>, %arg7: memref<32x32xf32, #tpu.memory_space<vmem>>, %arg8: memref<1x32xf32, #tpu.memory_space<vmem>>, %arg9: memref<1x32xf32, #tpu.memory_space<vmem>>, %arg10: memref<1x32xf32, #tpu.memory_space<vmem>>, %arg11: memref<1x4x8x8xf32, #tpu.memory_space<vmem>>, %arg12: memref<1x4x8x8xf32, #tpu.memory_space<vmem>>, %arg13: memref<1x4x8x8xf32, #tpu.memory_space<vmem>>) attributes {dimension_semantics = [#tpu.dimension_semantics<parallel>, #tpu.dimension_semantics<parallel>], iteration_bounds = array<i64: 2, 1>, scalar_prefetch = 0 : i64, scratch_operands = 0 : i64, tpu.core_type = #tpu.core_type<tc>, window_params = [{transform_indices = @transform_0, window_bounds = array<i64: 1, 8, 32>}, {pipeline_mode = #tpu.pipeline_mode<synchronous>, transform_indices = @transform_1, window_bounds = array<i64: 32, 32>}, {pipeline_mode = #tpu.pipeline_mode<synchronous>, transform_indices = @transform_2, window_bounds = array<i64: 1, 32>}, {pipeline_mode = #tpu.pipeline_mode<synchronous>, transform_indices = @transform_3, window_bounds = array<i64: 32, 32>}, {pipeline_mode = #tpu.pipeline_mode<synchronous>, transform_indices = @transform_4, window_bounds = array<i64: 1, 32>}, {pipeline_mode = #tpu.pipeline_mode<synchronous>, transform_indices = @transform_5, window_bounds = array<i64: 32, 32>}, {pipeline_mode = #tpu.pipeline_mode<synchronous>, transform_indices = @transform_6, window_bounds = array<i64: 1, 32>}, {pipeline_mode = #tpu.pipeline_mode<synchronous>, transform_indices = @transform_7, window_bounds = array<i64: 1, 32>}, {pipeline_mode = #tpu.pipeline_mode<synchronous>, transform_indices = @transform_8, window_bounds = array<i64: 1, 32>}, {transform_indices = @transform_9, window_bounds = array<i64: 1, 4, 8, 8>}, {transform_indices = @transform_10, window_bounds = array<i64: 1, 4, 8, 8>}, {transform_indices = @transform_11, window_bounds = array<i64: 1, 4, 8, 8>}]} {
    %c0 = arith.constant 0 : index
    %c0_0 = arith.constant 0 : index
    %c0_1 = arith.constant 0 : index
    %0 = vector.load %arg2[%c0, %c0_0, %c0_1] : memref<1x8x32xf32, #tpu.memory_space<vmem>>, vector<1x8x32xf32>
    %1 = vector.shape_cast %0 : vector<1x8x32xf32> to vector<8x32xf32>
    %c0_2 = arith.constant 0 : index
    %c0_3 = arith.constant 0 : index
    %2 = vector.load %arg9[%c0_2, %c0_3] : memref<1x32xf32, #tpu.memory_space<vmem>>, vector<1x32xf32>
    %c0_4 = arith.constant 0 : index
    %c0_5 = arith.constant 0 : index
    %3 = vector.load %arg10[%c0_4, %c0_5] : memref<1x32xf32, #tpu.memory_space<vmem>>, vector<1x32xf32>
    %cst = arith.constant dense<0.000000e+00> : vector<8xf32>
    %4 = vector.multi_reduction <add>, %1, %cst [1] : vector<8x32xf32> to vector<8xf32>
    %5 = vector.shape_cast %4 : vector<8xf32> to vector<8x1xf32>
    %cst_6 = arith.constant 3.200000e+01 : f32
    %6 = vector.broadcast %cst_6 : f32 to vector<8x1xf32>
    %7 = arith.divf %5, %6 : vector<8x1xf32>
    %8 = vector.broadcast %7 : vector<8x1xf32> to vector<8x32xf32>
    %9 = arith.subf %1, %8 : vector<8x32xf32>
    %10 = arith.mulf %9, %9 : vector<8x32xf32>
    %cst_7 = arith.constant dense<0.000000e+00> : vector<8xf32>
    %11 = vector.multi_reduction <add>, %10, %cst_7 [1] : vector<8x32xf32> to vector<8xf32>
    %12 = vector.shape_cast %11 : vector<8xf32> to vector<8x1xf32>
    %cst_8 = arith.constant 3.100000e+01 : f32
    %13 = vector.broadcast %cst_8 : f32 to vector<8x1xf32>
    %14 = arith.divf %12, %13 : vector<8x1xf32>
    %15 = math.sqrt %14 : vector<8x1xf32>
    %cst_9 = arith.constant 9.99999997E-7 : f32
    %16 = vector.broadcast %cst_9 : f32 to vector<8x1xf32>
    %17 = arith.addf %15, %16 : vector<8x1xf32>
    %18 = tpu.reciprocal %17 : vector<8x1xf32> -> vector<8x1xf32>
    %19 = vector.broadcast %7 : vector<8x1xf32> to vector<8x32xf32>
    %20 = arith.subf %1, %19 : vector<8x32xf32>
    %21 = vector.broadcast %2 : vector<1x32xf32> to vector<8x32xf32>
    %22 = arith.mulf %21, %20 : vector<8x32xf32>
    %23 = vector.broadcast %18 : vector<8x1xf32> to vector<8x32xf32>
    %24 = arith.mulf %22, %23 : vector<8x32xf32>
    %25 = vector.broadcast %3 : vector<1x32xf32> to vector<8x32xf32>
    %26 = arith.addf %24, %25 : vector<8x32xf32>
    %c0_10 = arith.constant 0 : index
    %c0_11 = arith.constant 0 : index
    %27 = vector.load %arg3[%c0_10, %c0_11] : memref<32x32xf32, #tpu.memory_space<vmem>>, vector<32x32xf32>
    %cst_12 = arith.constant dense<0.000000e+00> : vector<8x32xf32>
    %28 = tpu.matmul %26, %27, %cst_12 {dimension_numbers = #tpu.dot_dimension_numbers<[1], [0], [0], [1], [0, 0, 1, 1], [], []>} : vector<8x32xf32>, vector<32x32xf32>, vector<8x32xf32> -> vector<8x32xf32>
    %c0_13 = arith.constant 0 : index
    %c0_14 = arith.constant 0 : index
    %29 = vector.load %arg4[%c0_13, %c0_14] : memref<1x32xf32, #tpu.memory_space<vmem>>, vector<1x32xf32>
    %30 = vector.broadcast %29 : vector<1x32xf32> to vector<8x32xf32>
    %31 = arith.addf %28, %30 : vector<8x32xf32>
    %c0_15 = arith.constant 0 : index
    %c0_16 = arith.constant 0 : index
    %32 = vector.load %arg5[%c0_15, %c0_16] : memref<32x32xf32, #tpu.memory_space<vmem>>, vector<32x32xf32>
    %cst_17 = arith.constant dense<0.000000e+00> : vector<8x32xf32>
    %33 = tpu.matmul %26, %32, %cst_17 {dimension_numbers = #tpu.dot_dimension_numbers<[1], [0], [0], [1], [0, 0, 1, 1], [], []>} : vector<8x32xf32>, vector<32x32xf32>, vector<8x32xf32> -> vector<8x32xf32>
    %c0_18 = arith.constant 0 : index
    %c0_19 = arith.constant 0 : index
    %34 = vector.load %arg6[%c0_18, %c0_19] : memref<1x32xf32, #tpu.memory_space<vmem>>, vector<1x32xf32>
    %35 = vector.broadcast %34 : vector<1x32xf32> to vector<8x32xf32>
    %36 = arith.addf %33, %35 : vector<8x32xf32>
    %c0_20 = arith.constant 0 : index
    %c0_21 = arith.constant 0 : index
    %37 = vector.load %arg7[%c0_20, %c0_21] : memref<32x32xf32, #tpu.memory_space<vmem>>, vector<32x32xf32>
    %cst_22 = arith.constant dense<0.000000e+00> : vector<8x32xf32>
    %38 = tpu.matmul %26, %37, %cst_22 {dimension_numbers = #tpu.dot_dimension_numbers<[1], [0], [0], [1], [0, 0, 1, 1], [], []>} : vector<8x32xf32>, vector<32x32xf32>, vector<8x32xf32> -> vector<8x32xf32>
    %c0_23 = arith.constant 0 : index
    %c0_24 = arith.constant 0 : index
    %39 = vector.load %arg8[%c0_23, %c0_24] : memref<1x32xf32, #tpu.memory_space<vmem>>, vector<1x32xf32>
    %40 = vector.broadcast %39 : vector<1x32xf32> to vector<8x32xf32>
    %41 = arith.addf %38, %40 : vector<8x32xf32>
    %42 = vector.extract_strided_slice %31 {offsets = [0, 0], sizes = [8, 8], strides = [1, 1]} : vector<8x32xf32> to vector<8x8xf32>
    %c0_25 = arith.constant 0 : index
    %c0_26 = arith.constant 0 : index
    %c0_27 = arith.constant 0 : index
    %c0_28 = arith.constant 0 : index
    %43 = vector.load %arg11[%c0_25, %c0_26, %c0_27, %c0_28] : memref<1x4x8x8xf32, #tpu.memory_space<vmem>>, vector<1x1x8x8xf32>
    %44 = vector.shape_cast %43 : vector<1x1x8x8xf32> to vector<8x8xf32>
    %45 = vector.shape_cast %42 : vector<8x8xf32> to vector<1x1x8x8xf32>
    tpu.vector_store %arg11[%c0_25, %c0_26, %c0_27, %c0_28], %45 {strides = array<i32>} : memref<1x4x8x8xf32, #tpu.memory_space<vmem>>, vector<1x1x8x8xf32>,
    %46 = vector.extract_strided_slice %36 {offsets = [0, 0], sizes = [8, 8], strides = [1, 1]} : vector<8x32xf32> to vector<8x8xf32>
    %c0_29 = arith.constant 0 : index
    %c0_30 = arith.constant 0 : index
    %c0_31 = arith.constant 0 : index
    %c0_32 = arith.constant 0 : index
    %47 = vector.load %arg12[%c0_29, %c0_30, %c0_31, %c0_32] : memref<1x4x8x8xf32, #tpu.memory_space<vmem>>, vector<1x1x8x8xf32>
    %48 = vector.shape_cast %47 : vector<1x1x8x8xf32> to vector<8x8xf32>
    %49 = vector.shape_cast %46 : vector<8x8xf32> to vector<1x1x8x8xf32>
    tpu.vector_store %arg12[%c0_29, %c0_30, %c0_31, %c0_32], %49 {strides = array<i32>} : memref<1x4x8x8xf32, #tpu.memory_space<vmem>>, vector<1x1x8x8xf32>,
    %50 = vector.extract_strided_slice %41 {offsets = [0, 0], sizes = [8, 8], strides = [1, 1]} : vector<8x32xf32> to vector<8x8xf32>
    %c0_33 = arith.constant 0 : index
    %c0_34 = arith.constant 0 : index
    %c0_35 = arith.constant 0 : index
    %c0_36 = arith.constant 0 : index
    %51 = vector.load %arg13[%c0_33, %c0_34, %c0_35, %c0_36] : memref<1x4x8x8xf32, #tpu.memory_space<vmem>>, vector<1x1x8x8xf32>
    %52 = vector.shape_cast %51 : vector<1x1x8x8xf32> to vector<8x8xf32>
    %53 = vector.shape_cast %50 : vector<8x8xf32> to vector<1x1x8x8xf32>
    tpu.vector_store %arg13[%c0_33, %c0_34, %c0_35, %c0_36], %53 {strides = array<i32>} : memref<1x4x8x8xf32, #tpu.memory_space<vmem>>, vector<1x1x8x8xf32>,
    %54 = vector.extract_strided_slice %31 {offsets = [0, 8], sizes = [8, 8], strides = [1, 1]} : vector<8x32xf32> to vector<8x8xf32>
    %c0_37 = arith.constant 0 : index
    %c1 = arith.constant 1 : index
    %c0_38 = arith.constant 0 : index
    %c0_39 = arith.constant 0 : index
    %55 = vector.load %arg11[%c0_37, %c1, %c0_38, %c0_39] : memref<1x4x8x8xf32, #tpu.memory_space<vmem>>, vector<1x1x8x8xf32>
    %56 = vector.shape_cast %55 : vector<1x1x8x8xf32> to vector<8x8xf32>
    %57 = vector.shape_cast %54 : vector<8x8xf32> to vector<1x1x8x8xf32>
    tpu.vector_store %arg11[%c0_37, %c1, %c0_38, %c0_39], %57 {strides = array<i32>} : memref<1x4x8x8xf32, #tpu.memory_space<vmem>>, vector<1x1x8x8xf32>,
    %58 = vector.extract_strided_slice %36 {offsets = [0, 8], sizes = [8, 8], strides = [1, 1]} : vector<8x32xf32> to vector<8x8xf32>
    %c0_40 = arith.constant 0 : index
    %c1_41 = arith.constant 1 : index
    %c0_42 = arith.constant 0 : index
    %c0_43 = arith.constant 0 : index
    %59 = vector.load %arg12[%c0_40, %c1_41, %c0_42, %c0_43] : memref<1x4x8x8xf32, #tpu.memory_space<vmem>>, vector<1x1x8x8xf32>
    %60 = vector.shape_cast %59 : vector<1x1x8x8xf32> to vector<8x8xf32>
    %61 = vector.shape_cast %58 : vector<8x8xf32> to vector<1x1x8x8xf32>
    tpu.vector_store %arg12[%c0_40, %c1_41, %c0_42, %c0_43], %61 {strides = array<i32>} : memref<1x4x8x8xf32, #tpu.memory_space<vmem>>, vector<1x1x8x8xf32>,
    %62 = vector.extract_strided_slice %41 {offsets = [0, 8], sizes = [8, 8], strides = [1, 1]} : vector<8x32xf32> to vector<8x8xf32>
    %c0_44 = arith.constant 0 : index
    %c1_45 = arith.constant 1 : index
    %c0_46 = arith.constant 0 : index
    %c0_47 = arith.constant 0 : index
    %63 = vector.load %arg13[%c0_44, %c1_45, %c0_46, %c0_47] : memref<1x4x8x8xf32, #tpu.memory_space<vmem>>, vector<1x1x8x8xf32>
    %64 = vector.shape_cast %63 : vector<1x1x8x8xf32> to vector<8x8xf32>
    %65 = vector.shape_cast %62 : vector<8x8xf32> to vector<1x1x8x8xf32>
    tpu.vector_store %arg13[%c0_44, %c1_45, %c0_46, %c0_47], %65 {strides = array<i32>} : memref<1x4x8x8xf32, #tpu.memory_space<vmem>>, vector<1x1x8x8xf32>,
    %66 = vector.extract_strided_slice %31 {offsets = [0, 16], sizes = [8, 8], strides = [1, 1]} : vector<8x32xf32> to vector<8x8xf32>
    %c0_48 = arith.constant 0 : index
    %c2 = arith.constant 2 : index
    %c0_49 = arith.constant 0 : index
    %c0_50 = arith.constant 0 : index
    %67 = vector.load %arg11[%c0_48, %c2, %c0_49, %c0_50] : memref<1x4x8x8xf32, #tpu.memory_space<vmem>>, vector<1x1x8x8xf32>
    %68 = vector.shape_cast %67 : vector<1x1x8x8xf32> to vector<8x8xf32>
    %69 = vector.shape_cast %66 : vector<8x8xf32> to vector<1x1x8x8xf32>
    tpu.vector_store %arg11[%c0_48, %c2, %c0_49, %c0_50], %69 {strides = array<i32>} : memref<1x4x8x8xf32, #tpu.memory_space<vmem>>, vector<1x1x8x8xf32>,
    %70 = vector.extract_strided_slice %36 {offsets = [0, 16], sizes = [8, 8], strides = [1, 1]} : vector<8x32xf32> to vector<8x8xf32>
    %c0_51 = arith.constant 0 : index
    %c2_52 = arith.constant 2 : index
    %c0_53 = arith.constant 0 : index
    %c0_54 = arith.constant 0 : index
    %71 = vector.load %arg12[%c0_51, %c2_52, %c0_53, %c0_54] : memref<1x4x8x8xf32, #tpu.memory_space<vmem>>, vector<1x1x8x8xf32>
    %72 = vector.shape_cast %71 : vector<1x1x8x8xf32> to vector<8x8xf32>
    %73 = vector.shape_cast %70 : vector<8x8xf32> to vector<1x1x8x8xf32>
    tpu.vector_store %arg12[%c0_51, %c2_52, %c0_53, %c0_54], %73 {strides = array<i32>} : memref<1x4x8x8xf32, #tpu.memory_space<vmem>>, vector<1x1x8x8xf32>,
    %74 = vector.extract_strided_slice %41 {offsets = [0, 16], sizes = [8, 8], strides = [1, 1]} : vector<8x32xf32> to vector<8x8xf32>
    %c0_55 = arith.constant 0 : index
    %c2_56 = arith.constant 2 : index
    %c0_57 = arith.constant 0 : index
    %c0_58 = arith.constant 0 : index
    %75 = vector.load %arg13[%c0_55, %c2_56, %c0_57, %c0_58] : memref<1x4x8x8xf32, #tpu.memory_space<vmem>>, vector<1x1x8x8xf32>
    %76 = vector.shape_cast %75 : vector<1x1x8x8xf32> to vector<8x8xf32>
    %77 = vector.shape_cast %74 : vector<8x8xf32> to vector<1x1x8x8xf32>
    tpu.vector_store %arg13[%c0_55, %c2_56, %c0_57, %c0_58], %77 {strides = array<i32>} : memref<1x4x8x8xf32, #tpu.memory_space<vmem>>, vector<1x1x8x8xf32>,
    %78 = vector.extract_strided_slice %31 {offsets = [0, 24], sizes = [8, 8], strides = [1, 1]} : vector<8x32xf32> to vector<8x8xf32>
    %c0_59 = arith.constant 0 : index
    %c3 = arith.constant 3 : index
    %c0_60 = arith.constant 0 : index
    %c0_61 = arith.constant 0 : index
    %79 = vector.load %arg11[%c0_59, %c3, %c0_60, %c0_61] : memref<1x4x8x8xf32, #tpu.memory_space<vmem>>, vector<1x1x8x8xf32>
    %80 = vector.shape_cast %79 : vector<1x1x8x8xf32> to vector<8x8xf32>
    %81 = vector.shape_cast %78 : vector<8x8xf32> to vector<1x1x8x8xf32>
    tpu.vector_store %arg11[%c0_59, %c3, %c0_60, %c0_61], %81 {strides = array<i32>} : memref<1x4x8x8xf32, #tpu.memory_space<vmem>>, vector<1x1x8x8xf32>,
    %82 = vector.extract_strided_slice %36 {offsets = [0, 24], sizes = [8, 8], strides = [1, 1]} : vector<8x32xf32> to vector<8x8xf32>
    %c0_62 = arith.constant 0 : index
    %c3_63 = arith.constant 3 : index
    %c0_64 = arith.constant 0 : index
    %c0_65 = arith.constant 0 : index
    %83 = vector.load %arg12[%c0_62, %c3_63, %c0_64, %c0_65] : memref<1x4x8x8xf32, #tpu.memory_space<vmem>>, vector<1x1x8x8xf32>
    %84 = vector.shape_cast %83 : vector<1x1x8x8xf32> to vector<8x8xf32>
    %85 = vector.shape_cast %82 : vector<8x8xf32> to vector<1x1x8x8xf32>
    tpu.vector_store %arg12[%c0_62, %c3_63, %c0_64, %c0_65], %85 {strides = array<i32>} : memref<1x4x8x8xf32, #tpu.memory_space<vmem>>, vector<1x1x8x8xf32>,
    %86 = vector.extract_strided_slice %41 {offsets = [0, 24], sizes = [8, 8], strides = [1, 1]} : vector<8x32xf32> to vector<8x8xf32>
    %c0_66 = arith.constant 0 : index
    %c3_67 = arith.constant 3 : index
    %c0_68 = arith.constant 0 : index
    %c0_69 = arith.constant 0 : index
    %87 = vector.load %arg13[%c0_66, %c3_67, %c0_68, %c0_69] : memref<1x4x8x8xf32, #tpu.memory_space<vmem>>, vector<1x1x8x8xf32>
    %88 = vector.shape_cast %87 : vector<1x1x8x8xf32> to vector<8x8xf32>
    %89 = vector.shape_cast %86 : vector<8x8xf32> to vector<1x1x8x8xf32>
    tpu.vector_store %arg13[%c0_66, %c3_67, %c0_68, %c0_69], %89 {strides = array<i32>} : memref<1x4x8x8xf32, #tpu.memory_space<vmem>>, vector<1x1x8x8xf32>,
    return
  }
  func.func @transform_0(%arg0: i32, %arg1: i32) -> (i32, i32, i32) {
    %c0_i32 = arith.constant 0 : i32
    %c0_i32_0 = arith.constant 0 : i32
    return %arg0, %arg1, %c0_i32 : i32, i32, i32
  }
  func.func @transform_1(%arg0: i32, %arg1: i32) -> (i32, i32) {
    %c0_i32 = arith.constant 0 : i32
    %c0_i32_0 = arith.constant 0 : i32
    %c0_i32_1 = arith.constant 0 : i32
    return %c0_i32, %c0_i32_0 : i32, i32
  }
  func.func @transform_2(%arg0: i32, %arg1: i32) -> (i32, i32) {
    %c0_i32 = arith.constant 0 : i32
    %c0_i32_0 = arith.constant 0 : i32
    %c0_i32_1 = arith.constant 0 : i32
    return %c0_i32, %c0_i32_0 : i32, i32
  }
  func.func @transform_3(%arg0: i32, %arg1: i32) -> (i32, i32) {
    %c0_i32 = arith.constant 0 : i32
    %c0_i32_0 = arith.constant 0 : i32
    %c0_i32_1 = arith.constant 0 : i32
    return %c0_i32, %c0_i32_0 : i32, i32
  }
  func.func @transform_4(%arg0: i32, %arg1: i32) -> (i32, i32) {
    %c0_i32 = arith.constant 0 : i32
    %c0_i32_0 = arith.constant 0 : i32
    %c0_i32_1 = arith.constant 0 : i32
    return %c0_i32, %c0_i32_0 : i32, i32
  }
  func.func @transform_5(%arg0: i32, %arg1: i32) -> (i32, i32) {
    %c0_i32 = arith.constant 0 : i32
    %c0_i32_0 = arith.constant 0 : i32
    %c0_i32_1 = arith.constant 0 : i32
    return %c0_i32, %c0_i32_0 : i32, i32
  }
  func.func @transform_6(%arg0: i32, %arg1: i32) -> (i32, i32) {
    %c0_i32 = arith.constant 0 : i32
    %c0_i32_0 = arith.constant 0 : i32
    %c0_i32_1 = arith.constant 0 : i32
    return %c0_i32, %c0_i32_0 : i32, i32
  }
  func.func @transform_7(%arg0: i32, %arg1: i32) -> (i32, i32) {
    %c0_i32 = arith.constant 0 : i32
    %c0_i32_0 = arith.constant 0 : i32
    %c0_i32_1 = arith.constant 0 : i32
    return %c0_i32, %c0_i32_0 : i32, i32
  }
  func.func @transform_8(%arg0: i32, %arg1: i32) -> (i32, i32) {
    %c0_i32 = arith.constant 0 : i32
    %c0_i32_0 = arith.constant 0 : i32
    %c0_i32_1 = arith.constant 0 : i32
    return %c0_i32, %c0_i32_0 : i32, i32
  }
  func.func @transform_9(%arg0: i32, %arg1: i32) -> (i32, i32, i32, i32) {
    %c0_i32 = arith.constant 0 : i32
    %c0_i32_0 = arith.constant 0 : i32
    %c0_i32_1 = arith.constant 0 : i32
    return %arg0, %c0_i32, %arg1, %c0_i32_0 : i32, i32, i32, i32
  }
  func.func @transform_10(%arg0: i32, %arg1: i32) -> (i32, i32, i32, i32) {
    %c0_i32 = arith.constant 0 : i32
    %c0_i32_0 = arith.constant 0 : i32
    %c0_i32_1 = arith.constant 0 : i32
    return %arg0, %c0_i32, %arg1, %c0_i32_0 : i32, i32, i32, i32
  }
  func.func @transform_11(%arg0: i32, %arg1: i32) -> (i32, i32, i32, i32) {
    %c0_i32 = arith.constant 0 : i32
    %c0_i32_0 = arith.constant 0 : i32
    %c0_i32_1 = arith.constant 0 : i32
    return %arg0, %c0_i32, %arg1, %c0_i32_0 : i32, i32, i32, i32
  }
}

</mosaic_0001>

<llo_original>
// kernel: tpu_custom_call.1
$region0: #{tpu_custom_call.1}
  #allocation0 [shape = 'u32[]', space=smem, size = 0x4, offset = 0x4, fixed_abs, tag = 'smem constant byte address 0x4 - core index']
  #allocation1 [shape = 'u32[144,128]{1,0:T(1,128)}', space=vmem, size = 0x12000, scoped, tag = 'internal scratch']
  %s0 = inlined_call_operand.hbm [shape: f32[2,8,32], index: 0, kind: input, shape index: {}]
  %s1 = inlined_call_operand.hbm [shape: f32[32,32], index: 1, kind: input, shape index: {}]
  %s2 = inlined_call_operand.vmem [shape: f32[1,32], index: 2, kind: input, shape index: {}]
  %s3 = inlined_call_operand.hbm [shape: f32[32,32], index: 3, kind: input, shape index: {}]
  %s4 = inlined_call_operand.vmem [shape: f32[1,32], index: 4, kind: input, shape index: {}]
  %s5 = inlined_call_operand.hbm [shape: f32[32,32], index: 5, kind: input, shape index: {}]
  %s6 = inlined_call_operand.vmem [shape: f32[1,32], index: 6, kind: input, shape index: {}]
  %s7 = inlined_call_operand.vmem [shape: f32[1,32], index: 7, kind: input, shape index: {}]
  %s8 = inlined_call_operand.vmem [shape: f32[1,32], index: 8, kind: input, shape index: {}]
  %s9 = inlined_call_operand.hbm [shape: f32[2,4,8,8], index: 9, kind: output, shape index: {0}]
  %s10 = inlined_call_operand.hbm [shape: f32[2,4,8,8], index: 10, kind: output, shape index: {1}]
  %s11 = inlined_call_operand.hbm [shape: f32[2,4,8,8], index: 11, kind: output, shape index: {2}]
  %12 = xla_tuple %s9, %s10, %s11
  %s13 = sld [smem:[#allocation0]]
  $region101: #{tpu_custom_call.1} parent=0
    _
  %s15 = ssub.s32 1, %s13
  %s16 = scalar_select 0, %s15, %s13
  $region1: #{tpu_custom_call.1} parent=0
    #allocation2 [shape = 'u8[8192]{0}', space=vmem, size = 0x2000, scoped, tag = 'input window, operand 0']
    #allocation3 [shape = 's32[2]{0}', space=sflag, size = 0x8, scoped, tag = 'scoped memory for tpu_custom_call.1']
    #allocation4 [shape = 's32[2]{0}', space=sflag, size = 0x8, scoped, tag = 'scoped memory for tpu_custom_call.1']
    #allocation5 [shape = 'u8[16384]{0}', space=vmem, size = 0x4000, scoped, tag = 'input window, operand 1, single buffered']
    #allocation6 [shape = 's32[1]{0}', space=sflag, size = 0x4, scoped, tag = 'scoped memory for tpu_custom_call.1']
    #allocation7 [shape = 'u8[16384]{0}', space=vmem, size = 0x4000, scoped, tag = 'input window, operand 3, single buffered']
    #allocation8 [shape = 'u8[16384]{0}', space=vmem, size = 0x4000, scoped, tag = 'input window, operand 5, single buffered']
    #allocation9 [shape = 's32[1]{0}', space=sflag, size = 0x4, scoped, tag = 'scoped memory for tpu_custom_call.1']
    #allocation10 [shape = 'u8[32768]{0}', space=vmem, size = 0x8000, scoped, tag = 'output window, operand 0']
    #allocation11 [shape = 'u8[32768]{0}', space=vmem, size = 0x8000, scoped, tag = 'output window, operand 1']
    #allocation12 [shape = 's32[2]{0}', space=sflag, size = 0x8, scoped, tag = 'scoped memory for tpu_custom_call.1']
    #allocation13 [shape = 'u8[32768]{0}', space=vmem, size = 0x8000, scoped, tag = 'output window, operand 2']
    %17 = vsyncpa [#allocation3], 0
    %s18 = scalar_lea.sflag [#allocation3], 1
    %19 = vsyncpa %s18, 0
    %20 = vsyncpa [#allocation6], 0
    %21 = vsyncpa [#allocation9], 0
    %22 = vsyncpa [#allocation4], 0
    %s23 = scalar_lea.sflag [#allocation4], 1
    %24 = vsyncpa %s23, 0
    %25 = vsyncpa [#allocation12], 0
    %s26 = scalar_lea.sflag [#allocation12], 1
    %27 = vsyncpa %s26, 0
    loop: start=0, step=1, limit=4
    $region2: #{tpu_custom_call.1} parent=1 // loop_pre_header
      _
    $region3: #{tpu_custom_call.1} parent=1 // loop_header
      %s29 = sphi 0, %s33
      %p30 = scmp.ge.s32.totalorder %s29, 4
      %s36 = sphi 0, %s48
      %s37 = sphi 0, %s44
      %s38 = sphi 0, %s36
      %s39 = sphi 0, %s37
      %s40 = sphi 0, %s38
      %s41 = sphi 0, %s39
      %s53 = sphi 0, %s55
      %s56 = sphi 0, %s53
      %s57 = sphi 0, %s56
      %s73 = sphi 0, %s57
      %s77 = sphi 0, %s77
      %s79 = sphi 0, %s77
      %s80 = sphi 0, %s79
      %s94 = sphi 0, %s80
      %s98 = sphi 0, %s98
      %s100 = sphi 0, %s98
      %s101 = sphi 0, %s100
      %s115 = sphi 0, %s101
      %s119 = sphi 0, %s119
      %s121 = sphi 0, %s119
      %s122 = sphi 0, %s121
      %s136 = sphi 0, %s122
      %s140 = sphi 0, %s140
      %s142 = sphi 0, %s140
      %s143 = sphi 0, %s142
      %s157 = sphi 0, %s143
      %s161 = sphi 0, %s161
      %s163 = sphi 0, %s161
      %s164 = sphi 0, %s163
      %s178 = sphi 0, %s164
      %s182 = sphi 0, %s182
      %s184 = sphi 0, %s182
      %s185 = sphi 0, %s184
      %s199 = sphi 0, %s185
      %s203 = sphi 0, %s203
      %s205 = sphi 0, %s203
      %s206 = sphi 0, %s205
      %s220 = sphi 0, %s206
      %s224 = sphi 0, %s224
      %s226 = sphi 0, %s224
      %s227 = sphi 0, %s226
      %s241 = sphi 0, %s227
      %s249 = sphi 0, %s251
      %s252 = sphi 0, %s249
      %s253 = sphi 0, %s252
      %s269 = sphi 0, %s253
      %s277 = sphi 0, %s279
      %s280 = sphi 0, %s277
      %s281 = sphi 0, %s280
      %s297 = sphi 0, %s281
      %s305 = sphi 0, %s307
      %s308 = sphi 0, %s305
      %s309 = sphi 0, %s308
      %s325 = sphi 0, %s309
    $region4: #{tpu_custom_call.1} parent=1 // loop_header_branch
      %32 = sbr.rel (%p30) target = $region8
    $region5: #{tpu_custom_call.1} parent=1 // loop_body
      %s34 = ssub.s32 %s29, 1
      %s35 = ssub.s32 %s29, 2
      %s42 = sadd.s32 1, %s37
      %p43 = scmp.ge.s32.totalorder %s42, 1
      %s44 = scalar_select %p43, 0, %s42
      %s45 = sadd.s32 1, %s36
      %s46 = scalar_select %p43, %s45, %s36
      %p47 = scmp.ge.s32.totalorder %s46, 2
      %s48 = scalar_select %p47, 0, %s46
      %s49 = ssub.s32 %s36, %s48
      %s50 = ssub.s32 %s37, %s44
      %s51 = sor.u32 %s49, %s50
      %p52 = scmp.eq.s32.totalorder %s51, 0
      %s54 = sadd.s32 %s53, 1
      %s55 = scalar_select %p52, %s53, %s54
      %p58 = pneg %p52
      %p59 = scmp.eq.s32.totalorder %s29, 1
      %p60 = por %p58, %p59
      %p61 = scmp.ne.s32.totalorder %s53, %s56
      %p62 = scmp.eq.s32.totalorder %s29, 0
      %p63 = por %p61, %p62
      %p64 = scmp.ne.s32.totalorder %s53, %s56
      %p65 = scmp.eq.s32.totalorder %s34, 1
      %p66 = por %p64, %p65
      %p67 = scmp.ne.s32.totalorder %s56, %s57
      %p68 = scmp.eq.s32.totalorder %s34, 0
      %p69 = por %p67, %p68
      %p70 = scmp.ne.s32.totalorder %s56, %s57
      %p71 = scmp.eq.s32.totalorder %s35, 1
      %p72 = por %p70, %p71
      %p74 = scmp.ne.s32.totalorder %s57, %s73
      %p75 = scmp.eq.s32.totalorder %s35, 0
      %p76 = por %p74, %p75
      %s78 = sadd.s32 %s77, 1
      %p81 = scmp.eq.s32.totalorder %s29, 1
      %p82 = scmp.ne.s32.totalorder %s77, %s79
      %p83 = scmp.eq.s32.totalorder %s29, 0
      %p84 = por %p82, %p83
      %p85 = scmp.ne.s32.totalorder %s77, %s79
      %p86 = scmp.eq.s32.totalorder %s34, 1
      %p87 = por %p85, %p86
      %p88 = scmp.ne.s32.totalorder %s79, %s80
      %p89 = scmp.eq.s32.totalorder %s34, 0
      %p90 = por %p88, %p89
      %p91 = scmp.ne.s32.totalorder %s79, %s80
      %p92 = scmp.eq.s32.totalorder %s35, 1
      %p93 = por %p91, %p92
      %p95 = scmp.ne.s32.totalorder %s80, %s94
      %p96 = scmp.eq.s32.totalorder %s35, 0
      %p97 = por %p95, %p96
      %s99 = sadd.s32 %s98, 1
      %p102 = scmp.eq.s32.totalorder %s29, 1
      %p103 = scmp.ne.s32.totalorder %s98, %s100
      %p104 = scmp.eq.s32.totalorder %s29, 0
      %p105 = por %p103, %p104
      %p106 = scmp.ne.s32.totalorder %s98, %s100
      %p107 = scmp.eq.s32.totalorder %s34, 1
      %p108 = por %p106, %p107
      %p109 = scmp.ne.s32.totalorder %s100, %s101
      %p110 = scmp.eq.s32.totalorder %s34, 0
      %p111 = por %p109, %p110
      %p112 = scmp.ne.s32.totalorder %s100, %s101
      %p113 = scmp.eq.s32.totalorder %s35, 1
      %p114 = por %p112, %p113
      %p116 = scmp.ne.s32.totalorder %s101, %s115
      %p117 = scmp.eq.s32.totalorder %s35, 0
      %p118 = por %p116, %p117
      %s120 = sadd.s32 %s119, 1
      %p123 = scmp.eq.s32.totalorder %s29, 1
      %p124 = scmp.ne.s32.totalorder %s119, %s121
      %p125 = scmp.eq.s32.totalorder %s29, 0
      %p126 = por %p124, %p125
      %p127 = scmp.ne.s32.totalorder %s119, %s121
      %p128 = scmp.eq.s32.totalorder %s34, 1
      %p129 = por %p127, %p128
      %p130 = scmp.ne.s32.totalorder %s121, %s122
      %p131 = scmp.eq.s32.totalorder %s34, 0
      %p132 = por %p130, %p131
      %p133 = scmp.ne.s32.totalorder %s121, %s122
      %p134 = scmp.eq.s32.totalorder %s35, 1
      %p135 = por %p133, %p134
      %p137 = scmp.ne.s32.totalorder %s122, %s136
      %p138 = scmp.eq.s32.totalorder %s35, 0
      %p139 = por %p137, %p138
      %s141 = sadd.s32 %s140, 1
      %p144 = scmp.eq.s32.totalorder %s29, 1
      %p145 = scmp.ne.s32.totalorder %s140, %s142
      %p146 = scmp.eq.s32.totalorder %s29, 0
      %p147 = por %p145, %p146
      %p148 = scmp.ne.s32.totalorder %s140, %s142
      %p149 = scmp.eq.s32.totalorder %s34, 1
      %p150 = por %p148, %p149
      %p151 = scmp.ne.s32.totalorder %s142, %s143
      %p152 = scmp.eq.s32.totalorder %s34, 0
      %p153 = por %p151, %p152
      %p154 = scmp.ne.s32.totalorder %s142, %s143
      %p155 = scmp.eq.s32.totalorder %s35, 1
      %p156 = por %p154, %p155
      %p158 = scmp.ne.s32.totalorder %s143, %s157
      %p159 = scmp.eq.s32.totalorder %s35, 0
      %p160 = por %p158, %p159
      %s162 = sadd.s32 %s161, 1
      %p165 = scmp.eq.s32.totalorder %s29, 1
      %p166 = scmp.ne.s32.totalorder %s161, %s163
      %p167 = scmp.eq.s32.totalorder %s29, 0
      %p168 = por %p166, %p167
      %p169 = scmp.ne.s32.totalorder %s161, %s163
      %p170 = scmp.eq.s32.totalorder %s34, 1
      %p171 = por %p169, %p170
      %p172 = scmp.ne.s32.totalorder %s163, %s164
      %p173 = scmp.eq.s32.totalorder %s34, 0
      %p174 = por %p172, %p173
      %p175 = scmp.ne.s32.totalorder %s163, %s164
      %p176 = scmp.eq.s32.totalorder %s35, 1
      %p177 = por %p175, %p176
      %p179 = scmp.ne.s32.totalorder %s164, %s178
      %p180 = scmp.eq.s32.totalorder %s35, 0
      %p181 = por %p179, %p180
      %s183 = sadd.s32 %s182, 1
      %p186 = scmp.eq.s32.totalorder %s29, 1
      %p187 = scmp.ne.s32.totalorder %s182, %s184
      %p188 = scmp.eq.s32.totalorder %s29, 0
      %p189 = por %p187, %p188
      %p190 = scmp.ne.s32.totalorder %s182, %s184
      %p191 = scmp.eq.s32.totalorder %s34, 1
      %p192 = por %p190, %p191
      %p193 = scmp.ne.s32.totalorder %s184, %s185
      %p194 = scmp.eq.s32.totalorder %s34, 0
      %p195 = por %p193, %p194
      %p196 = scmp.ne.s32.totalorder %s184, %s185
      %p197 = scmp.eq.s32.totalorder %s35, 1
      %p198 = por %p196, %p197
      %p200 = scmp.ne.s32.totalorder %s185, %s199
      %p201 = scmp.eq.s32.totalorder %s35, 0
      %p202 = por %p200, %p201
      %s204 = sadd.s32 %s203, 1
      %p207 = scmp.eq.s32.totalorder %s29, 1
      %p208 = scmp.ne.s32.totalorder %s203, %s205
      %p209 = scmp.eq.s32.totalorder %s29, 0
      %p210 = por %p208, %p209
      %p211 = scmp.ne.s32.totalorder %s203, %s205
      %p212 = scmp.eq.s32.totalorder %s34, 1
      %p213 = por %p211, %p212
      %p214 = scmp.ne.s32.totalorder %s205, %s206
      %p215 = scmp.eq.s32.totalorder %s34, 0
      %p216 = por %p214, %p215
      %p217 = scmp.ne.s32.totalorder %s205, %s206
      %p218 = scmp.eq.s32.totalorder %s35, 1
      %p219 = por %p217, %p218
      %p221 = scmp.ne.s32.totalorder %s206, %s220
      %p222 = scmp.eq.s32.totalorder %s35, 0
      %p223 = por %p221, %p222
      %s225 = sadd.s32 %s224, 1
      %p228 = scmp.eq.s32.totalorder %s29, 1
      %p229 = scmp.ne.s32.totalorder %s224, %s226
      %p230 = scmp.eq.s32.totalorder %s29, 0
      %p231 = por %p229, %p230
      %p232 = scmp.ne.s32.totalorder %s224, %s226
      %p233 = scmp.eq.s32.totalorder %s34, 1
      %p234 = por %p232, %p233
      %p235 = scmp.ne.s32.totalorder %s226, %s227
      %p236 = scmp.eq.s32.totalorder %s34, 0
      %p237 = por %p235, %p236
      %p238 = scmp.ne.s32.totalorder %s226, %s227
      %p239 = scmp.eq.s32.totalorder %s35, 1
      %p240 = por %p238, %p239
      %p242 = scmp.ne.s32.totalorder %s227, %s241
      %p243 = scmp.eq.s32.totalorder %s35, 0
      %p244 = por %p242, %p243
      %s245 = ssub.s32 %s36, %s48
      %s246 = ssub.s32 %s37, %s44
      %s247 = sor.u32 %s245, %s246
      %p248 = scmp.eq.s32.totalorder %s247, 0
      %s250 = sadd.s32 %s249, 1
      %s251 = scalar_select %p248, %s249, %s250
      %p254 = pneg %p248
      %p255 = scmp.eq.s32.totalorder %s29, 1
      %p256 = por %p254, %p255
      %p257 = scmp.ne.s32.totalorder %s249, %s252
      %p258 = scmp.eq.s32.totalorder %s29, 0
      %p259 = por %p257, %p258
      %p260 = scmp.ne.s32.totalorder %s249, %s252
      %p261 = scmp.eq.s32.totalorder %s34, 1
      %p262 = por %p260, %p261
      %p263 = scmp.ne.s32.totalorder %s252, %s253
      %p264 = scmp.eq.s32.totalorder %s34, 0
      %p265 = por %p263, %p264
      %p266 = scmp.ne.s32.totalorder %s252, %s253
      %p267 = scmp.eq.s32.totalorder %s35, 1
      %p268 = por %p266, %p267
      %p270 = scmp.ne.s32.totalorder %s253, %s269
      %p271 = scmp.eq.s32.totalorder %s35, 0
      %p272 = por %p270, %p271
      %s273 = ssub.s32 %s36, %s48
      %s274 = ssub.s32 %s37, %s44
      %s275 = sor.u32 %s273, %s274
      %p276 = scmp.eq.s32.totalorder %s275, 0
      %s278 = sadd.s32 %s277, 1
      %s279 = scalar_select %p276, %s277, %s278
      %p282 = pneg %p276
      %p283 = scmp.eq.s32.totalorder %s29, 1
      %p284 = por %p282, %p283
      %p285 = scmp.ne.s32.totalorder %s277, %s280
      %p286 = scmp.eq.s32.totalorder %s29, 0
      %p287 = por %p285, %p286
      %p288 = scmp.ne.s32.totalorder %s277, %s280
      %p289 = scmp.eq.s32.totalorder %s34, 1
      %p290 = por %p288, %p289
      %p291 = scmp.ne.s32.totalorder %s280, %s281
      %p292 = scmp.eq.s32.totalorder %s34, 0
      %p293 = por %p291, %p292
      %p294 = scmp.ne.s32.totalorder %s280, %s281
      %p295 = scmp.eq.s32.totalorder %s35, 1
      %p296 = por %p294, %p295
      %p298 = scmp.ne.s32.totalorder %s281, %s297
      %p299 = scmp.eq.s32.totalorder %s35, 0
      %p300 = por %p298, %p299
      %s301 = ssub.s32 %s36, %s48
      %s302 = ssub.s32 %s37, %s44
      %s303 = sor.u32 %s301, %s302
      %p304 = scmp.eq.s32.totalorder %s303, 0
      %s306 = sadd.s32 %s305, 1
      %s307 = scalar_select %p304, %s305, %s306
      %p310 = pneg %p304
      %p311 = scmp.eq.s32.totalorder %s29, 1
      %p312 = por %p310, %p311
      %p313 = scmp.ne.s32.totalorder %s305, %s308
      %p314 = scmp.eq.s32.totalorder %s29, 0
      %p315 = por %p313, %p314
      %p316 = scmp.ne.s32.totalorder %s305, %s308
      %p317 = scmp.eq.s32.totalorder %s34, 1
      %p318 = por %p316, %p317
      %p319 = scmp.ne.s32.totalorder %s308, %s309
      %p320 = scmp.eq.s32.totalorder %s34, 0
      %p321 = por %p319, %p320
      %p322 = scmp.ne.s32.totalorder %s308, %s309
      %p323 = scmp.eq.s32.totalorder %s35, 1
      %p324 = por %p322, %p323
      %p326 = scmp.ne.s32.totalorder %s309, %s325
      %p327 = scmp.eq.s32.totalorder %s35, 0
      %p328 = por %p326, %p327
      %p329 = scmp.le.s32.totalorder 1, %s29
      %p330 = scmp.lt.s32.totalorder %s29, 3
      %p331 = pnand %p329, %p330
      %p332 = pneg %p331
      // Predicated region
      $region9: #{tpu_custom_call.1} parent=5 // pred_check
        _
      $region10: #{tpu_custom_call.1} parent=5 // pred_check_branch
        %334 = sbr.rel (%p331) target = $region12
      $region11: #{tpu_custom_call.1} parent=5 // pred_region
        %s335 = ssub.s32 %s29, 1
        // Predicated region
        $region13: #{tpu_custom_call.1} parent=11 // pred_check
          %p336 = pneg %p90
        $region14: #{tpu_custom_call.1} parent=11 // pred_check_branch
          %338 = sbr.rel (%p336) target = $region16
        $region15: #{tpu_custom_call.1} parent=11 // pred_region
          %s340 = ssub.s32 512, 512
          %341 = vsyncadd [#allocation6], %s340
          %s342 = sshll.u32 [#allocation5], 4
          %s343 = int_to_ptr.vmem [resolvable:$true] %s342
          %348 = dma.hbm_to_vmem [thread:$0]  %s1, 512, %s343, [#allocation6], 128, 128, 8
        $region16: #{tpu_custom_call.1} parent=11 // pred_fallthru
          _
        // Predicated region
        $region17: #{tpu_custom_call.1} parent=11 // pred_check
          %p349 = pneg %p111
        $region18: #{tpu_custom_call.1} parent=11 // pred_check_branch
          %351 = sbr.rel (%p349) target = $region20
        $region19: #{tpu_custom_call.1} parent=11 // pred_region
          _
        $region20: #{tpu_custom_call.1} parent=11 // pred_fallthru
          _
        // Predicated region
        $region21: #{tpu_custom_call.1} parent=11 // pred_check
          %p352 = pneg %p132
        $region22: #{tpu_custom_call.1} parent=11 // pred_check_branch
          %354 = sbr.rel (%p352) target = $region24
        $region23: #{tpu_custom_call.1} parent=11 // pred_region
          %s356 = ssub.s32 512, 512
          %357 = vsyncadd [#allocation6], %s356
          %s358 = sshll.u32 [#allocation7], 4
          %s359 = int_to_ptr.vmem [resolvable:$true] %s358
          %364 = dma.hbm_to_vmem [thread:$0]  %s3, 512, %s359, [#allocation6], 128, 128, 8
        $region24: #{tpu_custom_call.1} parent=11 // pred_fallthru
          _
        // Predicated region
        $region25: #{tpu_custom_call.1} parent=11 // pred_check
          %p365 = pneg %p153
        $region26: #{tpu_custom_call.1} parent=11 // pred_check_branch
          %367 = sbr.rel (%p365) target = $region28
        $region27: #{tpu_custom_call.1} parent=11 // pred_region
          _
        $region28: #{tpu_custom_call.1} parent=11 // pred_fallthru
          _
        // Predicated region
        $region29: #{tpu_custom_call.1} parent=11 // pred_check
          %p368 = pneg %p174
        $region30: #{tpu_custom_call.1} parent=11 // pred_check_branch
          %370 = sbr.rel (%p368) target = $region32
        $region31: #{tpu_custom_call.1} parent=11 // pred_region
          %s372 = ssub.s32 512, 512
          %373 = vsyncadd [#allocation9], %s372
          %s374 = sshll.u32 [#allocation8], 4
          %s375 = int_to_ptr.vmem [resolvable:$true] %s374
          %380 = dma.hbm_to_vmem [thread:$0]  %s5, 512, %s375, [#allocation9], 128, 128, 8
        $region32: #{tpu_custom_call.1} parent=11 // pred_fallthru
          _
        // Predicated region
        $region33: #{tpu_custom_call.1} parent=11 // pred_check
          %p381 = pneg %p195
        $region34: #{tpu_custom_call.1} parent=11 // pred_check_branch
          %383 = sbr.rel (%p381) target = $region36
        $region35: #{tpu_custom_call.1} parent=11 // pred_region
          _
        $region36: #{tpu_custom_call.1} parent=11 // pred_fallthru
          _
        // Predicated region
        $region37: #{tpu_custom_call.1} parent=11 // pred_check
          %p384 = pneg %p216
        $region38: #{tpu_custom_call.1} parent=11 // pred_check_branch
          %386 = sbr.rel (%p384) target = $region40
        $region39: #{tpu_custom_call.1} parent=11 // pred_region
          _
        $region40: #{tpu_custom_call.1} parent=11 // pred_fallthru
          _
        // Predicated region
        $region41: #{tpu_custom_call.1} parent=11 // pred_check
          %p387 = pneg %p237
        $region42: #{tpu_custom_call.1} parent=11 // pred_check_branch
          %389 = sbr.rel (%p387) target = $region44
        $region43: #{tpu_custom_call.1} parent=11 // pred_region
          _
        $region44: #{tpu_custom_call.1} parent=11 // pred_fallthru
          _
      $region12: #{tpu_custom_call.1} parent=5 // pred_fallthru
        _
      %p390 = scmp.lt.s32.totalorder %s29, 2
      // Predicated region
      $region45: #{tpu_custom_call.1} parent=5 // pred_check
        %p391 = pneg %p390
      $region46: #{tpu_custom_call.1} parent=5 // pred_check_branch
        %393 = sbr.rel (%p391) target = $region48
      $region47: #{tpu_custom_call.1} parent=5 // pred_region
        // Predicated region
        $region49: #{tpu_custom_call.1} parent=47 // pred_check
          %p394 = pneg %p63
        $region50: #{tpu_custom_call.1} parent=47 // pred_check_branch
          %396 = sbr.rel (%p394) target = $region52
        $region51: #{tpu_custom_call.1} parent=47 // pred_region
          %s397 = sand.u32 %s53, 1
          %s398 = scalar_lea.sflag [#allocation3], %s397
          %s399 = sand.u32 %s53, 1
          %s400 = smul.addr %s399, 8
          %s401 = scalar_lea.vmem [#allocation2], %s400
          %s403 = ssub.s32 128, 128
          %404 = vsyncadd %s398, %s403
          %s405 = sadd.s32 %s37, %s36
          %s406 = smul.addr %s405, 128
          %s407 = scalar_lea.hbm %s0, %s406
          %s409 = sshll.u32 %s401, 4
          %s410 = int_to_ptr.vmem [resolvable:$true] %s409
          %412 = dma.hbm_to_vmem [thread:$0]  %s407, 128, %s410, %s398
        $region52: #{tpu_custom_call.1} parent=47 // pred_fallthru
          _
      $region48: #{tpu_custom_call.1} parent=5 // pred_fallthru
        _
      %p413 = scmp.le.s32.totalorder 1, %s29
      %p414 = scmp.lt.s32.totalorder %s29, 3
      %p415 = pnand %p413, %p414
      %p416 = pneg %p415
      // Predicated region
      $region53: #{tpu_custom_call.1} parent=5 // pred_check
        _
      $region54: #{tpu_custom_call.1} parent=5 // pred_check_branch
        %418 = sbr.rel (%p415) target = $region56
      $region55: #{tpu_custom_call.1} parent=5 // pred_region
        %s419 = ssub.s32 %s29, 1
        %s420 = sand.u32 %s56, 1
        %s421 = scalar_lea.sflag [#allocation3], %s420
        %s422 = sand.u32 %s56, 1
        %s423 = smul.addr %s422, 8
        %s424 = scalar_lea.vmem [#allocation2], %s423
        // Predicated region
        $region57: #{tpu_custom_call.1} parent=55 // pred_check
          %p425 = pneg %p69
        $region58: #{tpu_custom_call.1} parent=55 // pred_check_branch
          %427 = sbr.rel (%p425) target = $region60
        $region59: #{tpu_custom_call.1} parent=55 // pred_region
          %428 = dma.done %s421, 128
        $region60: #{tpu_custom_call.1} parent=55 // pred_fallthru
          _
        // Predicated region
        $region61: #{tpu_custom_call.1} parent=55 // pred_check
          %p429 = pneg %p90
        $region62: #{tpu_custom_call.1} parent=55 // pred_check_branch
          %431 = sbr.rel (%p429) target = $region64
        $region63: #{tpu_custom_call.1} parent=55 // pred_region
          %432 = dma.done [#allocation6], 512
        $region64: #{tpu_custom_call.1} parent=55 // pred_fallthru
          _
        // Predicated region
        $region65: #{tpu_custom_call.1} parent=55 // pred_check
          %p433 = pneg %p132
        $region66: #{tpu_custom_call.1} parent=55 // pred_check_branch
          %435 = sbr.rel (%p433) target = $region68
        $region67: #{tpu_custom_call.1} parent=55 // pred_region
          %436 = dma.done [#allocation6], 512
        $region68: #{tpu_custom_call.1} parent=55 // pred_fallthru
          _
        // Predicated region
        $region69: #{tpu_custom_call.1} parent=55 // pred_check
          %p437 = pneg %p174
        $region70: #{tpu_custom_call.1} parent=55 // pred_check_branch
          %439 = sbr.rel (%p437) target = $region72
        $region71: #{tpu_custom_call.1} parent=55 // pred_region
          %440 = dma.done [#allocation9], 512
        $region72: #{tpu_custom_call.1} parent=55 // pred_fallthru
          _
        %s441 = sand.u32 %s56, 1
        %s442 = scalar_lea.sflag [#allocation3], %s441
        %s443 = sand.u32 %s56, 1
        %s444 = smul.addr %s443, 8
        %s445 = scalar_lea.vmem [#allocation2], %s444
        %p446 = pneg %p69
        %p447 = pneg %p66
        %p448 = pneg %p90
        %p449 = pneg %p87
        %p450 = pneg %p111
        %p451 = pneg %p108
        %p452 = pneg %p132
        %p453 = pneg %p129
        %p454 = pneg %p153
        %p455 = pneg %p150
        %p456 = pneg %p174
        %p457 = pneg %p171
        %p458 = pneg %p195
        %p459 = pneg %p192
        %p460 = pneg %p216
        %p461 = pneg %p213
        %p462 = pneg %p237
        %p463 = pneg %p234
        %p464 = pneg %p265
        %p465 = pneg %p262
        %s466 = sand.u32 %s252, 1
        %s467 = scalar_lea.sflag [#allocation4], %s466
        %s468 = sand.u32 %s252, 1
        %s469 = smul.addr %s468, 32
        %s470 = scalar_lea.vmem [#allocation10], %s469
        %p471 = pneg %p293
        %p472 = pneg %p290
        %s473 = sand.u32 %s34, 1
        %s474 = scalar_lea.sflag [#allocation12], %s473
        %s475 = sand.u32 %s280, 1
        %s476 = smul.addr %s475, 32
        %s477 = scalar_lea.vmem [#allocation11], %s476
        %p478 = pneg %p321
        %p479 = pneg %p318
        %s480 = sand.u32 %s34, 1
        %s481 = scalar_lea.sflag [#allocation12], %s480
        %s482 = sand.u32 %s308, 1
        %s483 = smul.addr %s482, 32
        %s484 = scalar_lea.vmem [#allocation13], %s483
        %v485 = vld [vmem:[%s424] sm:$0xff]
        %v486 = vld [vmem:[%s7] sm:$0x1]
        %v487 = vld [vmem:[%s8] sm:$0x1]
        %vm488 = vcmask 261120
        %v489 = vsel %vm488, %v485, 0.0
        %490 = vadd.xlane.f32.xlu0 %v489
        %v491 = vpop.xlane.xlu0 %490
        %v492 = vrcp.pop 32.0
        %v493 = vmul.f32 %v491, %v492
        %v494 = vsub.f32 %v485, %v493
        %v495 = vmul.f32 %v494, %v494
        %v496 = vsel %vm488, %v495, 0.0
        %497 = vadd.xlane.f32.xlu0 %v496
        %v498 = vpop.xlane.xlu0 %497
        %v499 = vrcp.pop 31.0
        %v500 = vmul.f32 %v498, %v499
        %v501 = vrsqrt.pop %v500
        %v502 = vmul.f32 %v500, %v501
        %vm503 = vcmp.eq.f32.partialorder %v500, inf
        %v504 = vsel %vm503, %v500, %v502
        %vm505 = vcmp.eq.f32.partialorder %v500, 0.0
        %v506 = vand.u32 %v500, 2147483648
        %v507 = vsel %vm505, %v506, %v504
        %v508 = vadd.f32 %v507, 1e-06
        %v509 = vrcp.pop %v508
        %v511 = vlaneseq
        %v512 = vshrl.u32 %v511, 7
        %v513 = vsub.s32 0, %v512
        %v514 = vrot.slane %v486, %v513
        %v516 = vmul.f32 %v514, %v494
        %v517 = vmul.f32 %v516, %v509
        %v519 = vlaneseq
        %v520 = vshrl.u32 %v519, 7
        %v521 = vsub.s32 0, %v520
        %v522 = vrot.slane %v487, %v521
        %v524 = vadd.f32 %v517, %v522
        %v525 = vld [vmem:[#allocation5] sm:$0xff]
        %v526 = vld [vmem:[#allocation5 + $0x8] sm:$0xff]
        %v527 = vld [vmem:[#allocation5 + $0x10] sm:$0xff]
        %v528 = vld [vmem:[#allocation5 + $0x18] sm:$0xff]
        %v529 = vld [vmem:[%s2] sm:$0x1]
        %v531 = vlaneseq
        %v532 = vshrl.u32 %v531, 7
        %v533 = vsub.s32 0, %v532
        %v534 = vrot.slane %v529, %v533
        %v537 = vsel %vm488, %v524, 0
        %539 = vmatprep.subr.mxu0 0.0
        %540 = vmatpush1.msra.mxu0 %v525
        %541 = vmatprep.subr.mxu0 0.0
        %542 = vmatpush1.msra.mxu0 %v526
        %543 = vmatprep.subr.mxu0 0.0
        %544 = vmatpush1.msra.mxu0 %v527
        %545 = vmatprep.subr.mxu0 0.0
        %546 = vmatpush1.msra.mxu0 %v528
        %547 = vmatprep.subr.mxu0 0.0
        %548 = vmatpush1.msra.mxu0 0.0
        %549 = vmatprep.subr.mxu0 0.0
        %550 = vmatpush1.msra.mxu0 0.0
        %551 = vmatprep.subr.mxu0 0.0
        %552 = vmatpush1.msra.mxu0 0.0
        %553 = vmatprep.subr.mxu0 0.0
        %554 = vmatpush1.msra.mxu0 0.0
        %555 = vmatprep.subr.mxu0 0.0
        %556 = vmatpush1.msra.mxu0 0.0
        %557 = vmatprep.subr.mxu0 0.0
        %558 = vmatpush1.msra.mxu0 0.0
        %559 = vmatprep.subr.mxu0 0.0
        %560 = vmatpush1.msra.mxu0 0.0
        %561 = vmatprep.subr.mxu0 0.0
        %562 = vmatpush1.msra.mxu0 0.0
        %563 = vmatprep.subr.mxu0 0.0
        %564 = vmatpush1.msra.mxu0 0.0
        %565 = vmatprep.subr.mxu0 0.0
        %566 = vmatpush1.msra.mxu0 0.0
        %567 = vmatprep.subr.mxu0 0.0
        %568 = vmatpush1.msra.mxu0 0.0
        %569 = vmatprep.subr.mxu0 0.0
        %570 = vmatpush1.msra.mxu0 0.0
        %571 = vmatprep.subr.mxu0 0.0
        %572 = vmatpush1.msra.mxu0 0.0
        %573 = vmatprep.subr.mxu0 0.0
        %574 = vmatpush1.msra.mxu0 0.0
        %575 = vmatprep.subr.mxu0 0.0
        %576 = vmatpush1.msra.mxu0 0.0
        %577 = vmatprep.subr.mxu0 0.0
        %578 = vmatpush1.msra.mxu0 0.0
        %579 = vmatprep.subr.mxu0 0.0
        %580 = vmatpush1.msra.mxu0 0.0
        %581 = vmatprep.subr.mxu0 0.0
        %582 = vmatpush1.msra.mxu0 0.0
        %583 = vmatprep.subr.mxu0 0.0
        %584 = vmatpush1.msra.mxu0 0.0
        %585 = vmatprep.subr.mxu0 0.0
        %586 = vmatpush1.msra.mxu0 0.0
        %587 = vmatprep.subr.mxu0 0.0
        %588 = vmatpush1.msra.mxu0 0.0
        %589 = vmatprep.subr.mxu0 0.0
        %590 = vmatpush1.msra.mxu0 0.0
        %591 = vmatprep.subr.mxu0 0.0
        %592 = vmatpush1.msra.mxu0 0.0
        %593 = vmatprep.subr.mxu0 0.0
        %594 = vmatpush1.msra.mxu0 0.0
        %595 = vmatprep.subr.mxu0 0.0
        %596 = vmatpush1.msra.mxu0 0.0
        %597 = vmatprep.subr.mxu0 0.0
        %598 = vmatpush1.msra.mxu0 0.0
        %599 = vmatprep.subr.mxu0 0.0
        %600 = vmatpush1.msra.mxu0 0.0
        %601 = vmatprep.subr.mxu0 0.0
        %602 = vmatpush1.msra.mxu0 0.0
        %603 = vmatprep.mubr.f32.mxu0 0.0
        %604 = vmatmul.mubr.f32.gmra.mrb[0].mxu0 %v537
        %v605 = vpop.f32.mrb[0].mxu0
        %v606 = vadd.f32 %v534, %v605
        %v607 = vpop.f32.mrb[0].mxu0
        %608 = vdwg.mxu0
        %v609 = vld [vmem:[#allocation7] sm:$0xff]
        %v610 = vld [vmem:[#allocation7 + $0x8] sm:$0xff]
        %v611 = vld [vmem:[#allocation7 + $0x10] sm:$0xff]
        %v612 = vld [vmem:[#allocation7 + $0x18] sm:$0xff]
        %v613 = vld [vmem:[%s4] sm:$0x1]
        %v615 = vlaneseq
        %v616 = vshrl.u32 %v615, 7
        %v617 = vsub.s32 0, %v616
        %v618 = vrot.slane %v613, %v617
        %620 = vmatprep.subr.mxu0 0.0
        %621 = vmatpush1.msra.mxu0 %v609
        %622 = vmatprep.subr.mxu0 0.0
        %623 = vmatpush1.msra.mxu0 %v610
        %624 = vmatprep.subr.mxu0 0.0
        %625 = vmatpush1.msra.mxu0 %v611
        %626 = vmatprep.subr.mxu0 0.0
        %627 = vmatpush1.msra.mxu0 %v612
        %628 = vmatprep.subr.mxu0 0.0
        %629 = vmatpush1.msra.mxu0 0.0
        %630 = vmatprep.subr.mxu0 0.0
        %631 = vmatpush1.msra.mxu0 0.0
        %632 = vmatprep.subr.mxu0 0.0
        %633 = vmatpush1.msra.mxu0 0.0
        %634 = vmatprep.subr.mxu0 0.0
        %635 = vmatpush1.msra.mxu0 0.0
        %636 = vmatprep.subr.mxu0 0.0
        %637 = vmatpush1.msra.mxu0 0.0
        %638 = vmatprep.subr.mxu0 0.0
        %639 = vmatpush1.msra.mxu0 0.0
        %640 = vmatprep.subr.mxu0 0.0
        %641 = vmatpush1.msra.mxu0 0.0
        %642 = vmatprep.subr.mxu0 0.0
        %643 = vmatpush1.msra.mxu0 0.0
        %644 = vmatprep.subr.mxu0 0.0
        %645 = vmatpush1.msra.mxu0 0.0
        %646 = vmatprep.subr.mxu0 0.0
        %647 = vmatpush1.msra.mxu0 0.0
        %648 = vmatprep.subr.mxu0 0.0
        %649 = vmatpush1.msra.mxu0 0.0
        %650 = vmatprep.subr.mxu0 0.0
        %651 = vmatpush1.msra.mxu0 0.0
        %652 = vmatprep.subr.mxu0 0.0
        %653 = vmatpush1.msra.mxu0 0.0
        %654 = vmatprep.subr.mxu0 0.0
        %655 = vmatpush1.msra.mxu0 0.0
        %656 = vmatprep.subr.mxu0 0.0
        %657 = vmatpush1.msra.mxu0 0.0
        %658 = vmatprep.subr.mxu0 0.0
        %659 = vmatpush1.msra.mxu0 0.0
        %660 = vmatprep.subr.mxu0 0.0
        %661 = vmatpush1.msra.mxu0 0.0
        %662 = vmatprep.subr.mxu0 0.0
        %663 = vmatpush1.msra.mxu0 0.0
        %664 = vmatprep.subr.mxu0 0.0
        %665 = vmatpush1.msra.mxu0 0.0
        %666 = vmatprep.subr.mxu0 0.0
        %667 = vmatpush1.msra.mxu0 0.0
        %668 = vmatprep.subr.mxu0 0.0
        %669 = vmatpush1.msra.mxu0 0.0
        %670 = vmatprep.subr.mxu0 0.0
        %671 = vmatpush1.msra.mxu0 0.0
        %672 = vmatprep.subr.mxu0 0.0
        %673 = vmatpush1.msra.mxu0 0.0
        %674 = vmatprep.subr.mxu0 0.0
        %675 = vmatpush1.msra.mxu0 0.0
        %676 = vmatprep.subr.mxu0 0.0
        %677 = vmatpush1.msra.mxu0 0.0
        %678 = vmatprep.subr.mxu0 0.0
        %679 = vmatpush1.msra.mxu0 0.0
        %680 = vmatprep.subr.mxu0 0.0
        %681 = vmatpush1.msra.mxu0 0.0
        %682 = vmatprep.subr.mxu0 0.0
        %683 = vmatpush1.msra.mxu0 0.0
        %684 = vmatprep.mubr.f32.mxu0 0.0
        %685 = vmatmul.mubr.f32.gmra.mrb[0].mxu0 %v537
        %v686 = vpop.f32.mrb[0].mxu0
        %v687 = vadd.f32 %v618, %v686
        %v688 = vpop.f32.mrb[0].mxu0
        %689 = vdwg.mxu0
        %v690 = vld [vmem:[#allocation8] sm:$0xff]
        %v691 = vld [vmem:[#allocation8 + $0x8] sm:$0xff]
        %v692 = vld [vmem:[#allocation8 + $0x10] sm:$0xff]
        %v693 = vld [vmem:[#allocation8 + $0x18] sm:$0xff]
        %v694 = vld [vmem:[%s6] sm:$0x1]
        %v696 = vlaneseq
        %v697 = vshrl.u32 %v696, 7
        %v698 = vsub.s32 0, %v697
        %v699 = vrot.slane %v694, %v698
        %701 = vmatprep.subr.mxu0 0.0
        %702 = vmatpush1.msra.mxu0 %v690
        %703 = vmatprep.subr.mxu0 0.0
        %704 = vmatpush1.msra.mxu0 %v691
        %705 = vmatprep.subr.mxu0 0.0
        %706 = vmatpush1.msra.mxu0 %v692
        %707 = vmatprep.subr.mxu0 0.0
        %708 = vmatpush1.msra.mxu0 %v693
        %709 = vmatprep.subr.mxu0 0.0
        %710 = vmatpush1.msra.mxu0 0.0
        %711 = vmatprep.subr.mxu0 0.0
        %712 = vmatpush1.msra.mxu0 0.0
        %713 = vmatprep.subr.mxu0 0.0
        %714 = vmatpush1.msra.mxu0 0.0
        %715 = vmatprep.subr.mxu0 0.0
        %716 = vmatpush1.msra.mxu0 0.0
        %717 = vmatprep.subr.mxu0 0.0
        %718 = vmatpush1.msra.mxu0 0.0
        %719 = vmatprep.subr.mxu0 0.0
        %720 = vmatpush1.msra.mxu0 0.0
        %721 = vmatprep.subr.mxu0 0.0
        %722 = vmatpush1.msra.mxu0 0.0
        %723 = vmatprep.subr.mxu0 0.0
        %724 = vmatpush1.msra.mxu0 0.0
        %725 = vmatprep.subr.mxu0 0.0
        %726 = vmatpush1.msra.mxu0 0.0
        %727 = vmatprep.subr.mxu0 0.0
        %728 = vmatpush1.msra.mxu0 0.0
        %729 = vmatprep.subr.mxu0 0.0
        %730 = vmatpush1.msra.mxu0 0.0
        %731 = vmatprep.subr.mxu0 0.0
        %732 = vmatpush1.msra.mxu0 0.0
        %733 = vmatprep.subr.mxu0 0.0
        %734 = vmatpush1.msra.mxu0 0.0
        %735 = vmatprep.subr.mxu0 0.0
        %736 = vmatpush1.msra.mxu0 0.0
        %737 = vmatprep.subr.mxu0 0.0
        %738 = vmatpush1.msra.mxu0 0.0
        %739 = vmatprep.subr.mxu0 0.0
        %740 = vmatpush1.msra.mxu0 0.0
        %741 = vmatprep.subr.mxu0 0.0
        %742 = vmatpush1.msra.mxu0 0.0
        %743 = vmatprep.subr.mxu0 0.0
        %744 = vmatpush1.msra.mxu0 0.0
        %745 = vmatprep.subr.mxu0 0.0
        %746 = vmatpush1.msra.mxu0 0.0
        %747 = vmatprep.subr.mxu0 0.0
        %748 = vmatpush1.msra.mxu0 0.0
        %749 = vmatprep.subr.mxu0 0.0
        %750 = vmatpush1.msra.mxu0 0.0
        %751 = vmatprep.subr.mxu0 0.0
        %752 = vmatpush1.msra.mxu0 0.0
        %753 = vmatprep.subr.mxu0 0.0
        %754 = vmatpush1.msra.mxu0 0.0
        %755 = vmatprep.subr.mxu0 0.0
        %756 = vmatpush1.msra.mxu0 0.0
        %757 = vmatprep.subr.mxu0 0.0
        %758 = vmatpush1.msra.mxu0 0.0
        %759 = vmatprep.subr.mxu0 0.0
        %760 = vmatpush1.msra.mxu0 0.0
        %761 = vmatprep.subr.mxu0 0.0
        %762 = vmatpush1.msra.mxu0 0.0
        %763 = vmatprep.subr.mxu0 0.0
        %764 = vmatpush1.msra.mxu0 0.0
        %765 = vmatprep.mubr.f32.mxu0 0.0
        %766 = vmatmul.mubr.f32.gmra.mrb[0].mxu0 %v537
        %v767 = vpop.f32.mrb[0].mxu0
        %v768 = vadd.f32 %v699, %v767
        %v769 = vpop.f32.mrb[0].mxu0
        %770 = vdwg.mxu0
        %vm771 = vcmask 64512
        %772 = vst.msk [vmem:[%s470] sm:$0xff] %vm771, %v606
        %773 = vst.msk [vmem:[%s477] sm:$0xff] %vm771, %v687
        %774 = vst.msk [vmem:[%s484] sm:$0xff] %vm771, %v768
        %776 = vrot.lane.b32.xlu0 %v606, 120
        %v777 = vpop.permute.xlu0 %776
        %s779 = scalar_lea.vmem %s470, 8 [#allocation10]
        %780 = vst.msk [vmem:[%s779] sm:$0xff] %vm771, %v777
        %782 = vrot.lane.b32.xlu0 %v687, 120
        %v783 = vpop.permute.xlu0 %782
        %s785 = scalar_lea.vmem %s477, 8 [#allocation11]
        %786 = vst.msk [vmem:[%s785] sm:$0xff] %vm771, %v783
        %788 = vrot.lane.b32.xlu0 %v768, 120
        %v789 = vpop.permute.xlu0 %788
        %s791 = scalar_lea.vmem %s484, 8 [#allocation13]
        %792 = vst.msk [vmem:[%s791] sm:$0xff] %vm771, %v789
        %793 = vrot.lane.b32.xlu0 %v606, 112
        %v794 = vpop.permute.xlu0 %793
        %s796 = scalar_lea.vmem %s470, 16 [#allocation10]
        %797 = vst.msk [vmem:[%s796] sm:$0xff] %vm771, %v794
        %798 = vrot.lane.b32.xlu0 %v687, 112
        %v799 = vpop.permute.xlu0 %798
        %s801 = scalar_lea.vmem %s477, 16 [#allocation11]
        %802 = vst.msk [vmem:[%s801] sm:$0xff] %vm771, %v799
        %803 = vrot.lane.b32.xlu0 %v768, 112
        %v804 = vpop.permute.xlu0 %803
        %s806 = scalar_lea.vmem %s484, 16 [#allocation13]
        %807 = vst.msk [vmem:[%s806] sm:$0xff] %vm771, %v804
        %808 = vrot.lane.b32.xlu0 %v606, 104
        %v809 = vpop.permute.xlu0 %808
        %s811 = scalar_lea.vmem %s470, 24 [#allocation10]
        %812 = vst.msk [vmem:[%s811] sm:$0xff] %vm771, %v809
        %813 = vrot.lane.b32.xlu0 %v687, 104
        %v814 = vpop.permute.xlu0 %813
        %s816 = scalar_lea.vmem %s477, 24 [#allocation11]
        %817 = vst.msk [vmem:[%s816] sm:$0xff] %vm771, %v814
        %818 = vrot.lane.b32.xlu0 %v768, 104
        %v819 = vpop.permute.xlu0 %818
        %s821 = scalar_lea.vmem %s484, 24 [#allocation13]
        %822 = vst.msk [vmem:[%s821] sm:$0xff] %vm771, %v819
        %s823 = sand.u32 %s252, 1
        %s824 = scalar_lea.sflag [#allocation4], %s823
        %s825 = sand.u32 %s252, 1
        %s826 = smul.addr %s825, 32
        %s827 = scalar_lea.vmem [#allocation10], %s826
        %s828 = sand.u32 %s34, 1
        %s829 = scalar_lea.sflag [#allocation12], %s828
        %s830 = sand.u32 %s280, 1
        %s831 = smul.addr %s830, 32
        %s832 = scalar_lea.vmem [#allocation11], %s831
        %s833 = sand.u32 %s34, 1
        %s834 = scalar_lea.sflag [#allocation12], %s833
        %s835 = sand.u32 %s308, 1
        %s836 = smul.addr %s835, 32
        %s837 = scalar_lea.vmem [#allocation13], %s836
        // Predicated region
        $region73: #{tpu_custom_call.1} parent=55 // pred_check
          %p838 = pneg %p262
        $region74: #{tpu_custom_call.1} parent=55 // pred_check_branch
          %840 = sbr.rel (%p838) target = $region76
        $region75: #{tpu_custom_call.1} parent=55 // pred_region
          %s842 = ssub.s32 512, 512
          %843 = vsyncadd %s824, %s842
          %s844 = smul.addr %s38, 4
          %s845 = sadd.s32 %s39, %s844
          %s846 = smul.addr %s845, 128
          %s847 = scalar_lea.hbm %s9, %s846
          %s848 = sshll.u32 %s827, 4
          %s849 = int_to_ptr.vmem [resolvable:$true] %s848
          %854 = dma.vmem_to_hbm [thread:$0]  %s849, 512, %s847, %s824, 128, 128, 8
        $region76: #{tpu_custom_call.1} parent=55 // pred_fallthru
          _
        // Predicated region
        $region77: #{tpu_custom_call.1} parent=55 // pred_check
          %p855 = pneg %p290
        $region78: #{tpu_custom_call.1} parent=55 // pred_check_branch
          %857 = sbr.rel (%p855) target = $region80
        $region79: #{tpu_custom_call.1} parent=55 // pred_region
          %s859 = ssub.s32 512, 512
          %860 = vsyncadd %s829, %s859
          %s861 = smul.addr %s38, 4
          %s862 = sadd.s32 %s39, %s861
          %s863 = smul.addr %s862, 128
          %s864 = scalar_lea.hbm %s10, %s863
          %s865 = sshll.u32 %s832, 4
          %s866 = int_to_ptr.vmem [resolvable:$true] %s865
          %871 = dma.vmem_to_hbm [thread:$0]  %s866, 512, %s864, %s829, 128, 128, 8
        $region80: #{tpu_custom_call.1} parent=55 // pred_fallthru
          _
        // Predicated region
        $region81: #{tpu_custom_call.1} parent=55 // pred_check
          %p872 = pneg %p318
        $region82: #{tpu_custom_call.1} parent=55 // pred_check_branch
          %874 = sbr.rel (%p872) target = $region84
        $region83: #{tpu_custom_call.1} parent=55 // pred_region
          %s876 = ssub.s32 512, 512
          %877 = vsyncadd %s834, %s876
          %s878 = smul.addr %s38, 4
          %s879 = sadd.s32 %s39, %s878
          %s880 = smul.addr %s879, 128
          %s881 = scalar_lea.hbm %s11, %s880
          %s882 = sshll.u32 %s837, 4
          %s883 = int_to_ptr.vmem [resolvable:$true] %s882
          %888 = dma.vmem_to_hbm [thread:$0]  %s883, 512, %s881, %s834, 128, 128, 8
        $region84: #{tpu_custom_call.1} parent=55 // pred_fallthru
          _
      $region56: #{tpu_custom_call.1} parent=5 // pred_fallthru
        _
      %p889 = scmp.le.s32.totalorder 2, %s29
      // Predicated region
      $region85: #{tpu_custom_call.1} parent=5 // pred_check
        %p890 = pneg %p889
      $region86: #{tpu_custom_call.1} parent=5 // pred_check_branch
        %892 = sbr.rel (%p890) target = $region88
      $region87: #{tpu_custom_call.1} parent=5 // pred_region
        %s893 = ssub.s32 %s29, 2
        // Predicated region
        $region89: #{tpu_custom_call.1} parent=87 // pred_check
          %p894 = pneg %p268
        $region90: #{tpu_custom_call.1} parent=87 // pred_check_branch
          %896 = sbr.rel (%p894) target = $region92
        $region91: #{tpu_custom_call.1} parent=87 // pred_region
          %s897 = sand.u32 %s253, 1
          %s898 = scalar_lea.sflag [#allocation4], %s897
          %s899 = sand.u32 %s253, 1
          %s900 = smul.addr %s899, 32
          %s901 = scalar_lea.vmem [#allocation10], %s900
          %902 = dma.done %s898, 512
        $region92: #{tpu_custom_call.1} parent=87 // pred_fallthru
          _
        // Predicated region
        $region93: #{tpu_custom_call.1} parent=87 // pred_check
          %p903 = pneg %p296
        $region94: #{tpu_custom_call.1} parent=87 // pred_check_branch
          %905 = sbr.rel (%p903) target = $region96
        $region95: #{tpu_custom_call.1} parent=87 // pred_region
          %s906 = sand.u32 %s35, 1
          %s907 = scalar_lea.sflag [#allocation12], %s906
          %s908 = sand.u32 %s281, 1
          %s909 = smul.addr %s908, 32
          %s910 = scalar_lea.vmem [#allocation11], %s909
          %911 = dma.done %s907, 512
        $region96: #{tpu_custom_call.1} parent=87 // pred_fallthru
          _
        // Predicated region
        $region97: #{tpu_custom_call.1} parent=87 // pred_check
          %p912 = pneg %p324
        $region98: #{tpu_custom_call.1} parent=87 // pred_check_branch
          %914 = sbr.rel (%p912) target = $region100
        $region99: #{tpu_custom_call.1} parent=87 // pred_region
          %s915 = sand.u32 %s35, 1
          %s916 = scalar_lea.sflag [#allocation12], %s915
          %s917 = sand.u32 %s309, 1
          %s918 = smul.addr %s917, 32
          %s919 = scalar_lea.vmem [#allocation13], %s918
          %920 = dma.done %s916, 512
        $region100: #{tpu_custom_call.1} parent=87 // pred_fallthru
          _
      $region88: #{tpu_custom_call.1} parent=5 // pred_fallthru
        _
    $region6: #{tpu_custom_call.1} parent=1 // loop_footer
      %s33 = sadd.s32 1, %s29
    $region7: #{tpu_custom_call.1} parent=1 // loop_footer_branch
      %28 = sbr.rel target = $region3
    $region8: #{tpu_custom_call.1} parent=1 // loop_exit
      _
    %921 = vsyncpa [#allocation3], 1
    %s922 = scalar_lea.sflag [#allocation3], 1
    %923 = vsyncpa %s922, 1
    %924 = vsyncpa [#allocation6], 1
    %925 = vsyncpa [#allocation9], 1
    %926 = vsyncpa [#allocation4], 1
    %s927 = scalar_lea.sflag [#allocation4], 1
    %928 = vsyncpa %s927, 1
    %929 = vsyncpa [#allocation12], 1
    %s930 = scalar_lea.sflag [#allocation12], 1
    %931 = vsyncpa %s930, 1

// kernel: tpu_custom_call.1
$region0: #{tpu_custom_call.1}
  #allocation0 [shape = 'u32[]', space=smem, size = 0x4, offset = 0x4, fixed_abs, tag = 'smem constant byte address 0x4 - core index']
  #allocation1 [shape = 'u32[144,128]{1,0:T(1,128)}', space=vmem, size = 0x12000, scoped, tag = 'internal scratch']
  %s0 = inlined_call_operand.hbm [shape: f32[2,8,32], index: 0, kind: input, shape index: {}]
  %s1 = inlined_call_operand.hbm [shape: f32[32,32], index: 1, kind: input, shape index: {}]
  %s2 = inlined_call_operand.vmem [shape: f32[1,32], index: 2, kind: input, shape index: {}]
  %s3 = inlined_call_operand.hbm [shape: f32[32,32], index: 3, kind: input, shape index: {}]
  %s4 = inlined_call_operand.vmem [shape: f32[1,32], index: 4, kind: input, shape index: {}]
  %s5 = inlined_call_operand.hbm [shape: f32[32,32], index: 5, kind: input, shape index: {}]
  %s6 = inlined_call_operand.vmem [shape: f32[1,32], index: 6, kind: input, shape index: {}]
  %s7 = inlined_call_operand.vmem [shape: f32[1,32], index: 7, kind: input, shape index: {}]
  %s8 = inlined_call_operand.vmem [shape: f32[1,32], index: 8, kind: input, shape index: {}]
  %s9 = inlined_call_operand.hbm [shape: f32[2,4,8,8], index: 9, kind: output, shape index: {0}]
  %s10 = inlined_call_operand.hbm [shape: f32[2,4,8,8], index: 10, kind: output, shape index: {1}]
  %s11 = inlined_call_operand.hbm [shape: f32[2,4,8,8], index: 11, kind: output, shape index: {2}]
  %12 = xla_tuple %s9, %s10, %s11
  %s13 = sld [smem:[#allocation0]]
  $region101: #{tpu_custom_call.1} parent=0
    _
  %s15 = ssub.s32 1, %s13
  %s16 = scalar_select 0, %s15, %s13
  $region1: #{tpu_custom_call.1} parent=0
    #allocation2 [shape = 'u8[8192]{0}', space=vmem, size = 0x2000, scoped, tag = 'input window, operand 0']
    #allocation3 [shape = 's32[2]{0}', space=sflag, size = 0x8, scoped, tag = 'scoped memory for tpu_custom_call.1']
    #allocation4 [shape = 's32[2]{0}', space=sflag, size = 0x8, scoped, tag = 'scoped memory for tpu_custom_call.1']
    #allocation5 [shape = 'u8[16384]{0}', space=vmem, size = 0x4000, scoped, tag = 'input window, operand 1, single buffered']
    #allocation6 [shape = 's32[1]{0}', space=sflag, size = 0x4, scoped, tag = 'scoped memory for tpu_custom_call.1']
    #allocation7 [shape = 'u8[16384]{0}', space=vmem, size = 0x4000, scoped, tag = 'input window, operand 3, single buffered']
    #allocation8 [shape = 'u8[16384]{0}', space=vmem, size = 0x4000, scoped, tag = 'input window, operand 5, single buffered']
    #allocation9 [shape = 's32[1]{0}', space=sflag, size = 0x4, scoped, tag = 'scoped memory for tpu_custom_call.1']
    #allocation10 [shape = 'u8[32768]{0}', space=vmem, size = 0x8000, scoped, tag = 'output window, operand 0']
    #allocation11 [shape = 'u8[32768]{0}', space=vmem, size = 0x8000, scoped, tag = 'output window, operand 1']
    #allocation12 [shape = 's32[2]{0}', space=sflag, size = 0x8, scoped, tag = 'scoped memory for tpu_custom_call.1']
    #allocation13 [shape = 'u8[32768]{0}', space=vmem, size = 0x8000, scoped, tag = 'output window, operand 2']
    %17 = vsyncpa [#allocation3], 0
    %s18 = scalar_lea.sflag [#allocation3], 1
    %19 = vsyncpa %s18, 0
    %20 = vsyncpa [#allocation6], 0
    %21 = vsyncpa [#allocation9], 0
    %22 = vsyncpa [#allocation4], 0
    %s23 = scalar_lea.sflag [#allocation4], 1
    %24 = vsyncpa %s23, 0
    %25 = vsyncpa [#allocation12], 0
    %s26 = scalar_lea.sflag [#allocation12], 1
    %27 = vsyncpa %s26, 0
    loop: start=0, step=1, limit=4
    $region2: #{tpu_custom_call.1} parent=1 // loop_pre_header
      _
    $region3: #{tpu_custom_call.1} parent=1 // loop_header
      %s29 = sphi 0, %s33
      %p30 = scmp.ge.s32.totalorder %s29, 4
      %s36 = sphi 0, %s48
      %s37 = sphi 0, %s44
      %s38 = sphi 0, %s36
      %s39 = sphi 0, %s37
      %s40 = sphi 0, %s38
      %s41 = sphi 0, %s39
      %s53 = sphi 0, %s55
      %s56 = sphi 0, %s53
      %s57 = sphi 0, %s56
      %s73 = sphi 0, %s57
      %s77 = sphi 0, %s77
      %s79 = sphi 0, %s77
      %s80 = sphi 0, %s79
      %s94 = sphi 0, %s80
      %s98 = sphi 0, %s98
      %s100 = sphi 0, %s98
      %s101 = sphi 0, %s100
      %s115 = sphi 0, %s101
      %s119 = sphi 0, %s119
      %s121 = sphi 0, %s119
      %s122 = sphi 0, %s121
      %s136 = sphi 0, %s122
      %s140 = sphi 0, %s140
      %s142 = sphi 0, %s140
      %s143 = sphi 0, %s142
      %s157 = sphi 0, %s143
      %s161 = sphi 0, %s161
      %s163 = sphi 0, %s161
      %s164 = sphi 0, %s163
      %s178 = sphi 0, %s164
      %s182 = sphi 0, %s182
      %s184 = sphi 0, %s182
      %s185 = sphi 0, %s184
      %s199 = sphi 0, %s185
      %s203 = sphi 0, %s203
      %s205 = sphi 0, %s203
      %s206 = sphi 0, %s205
      %s220 = sphi 0, %s206
      %s224 = sphi 0, %s224
      %s226 = sphi 0, %s224
      %s227 = sphi 0, %s226
      %s241 = sphi 0, %s227
      %s249 = sphi 0, %s251
      %s252 = sphi 0, %s249
      %s253 = sphi 0, %s252
      %s269 = sphi 0, %s253
      %s277 = sphi 0, %s279
      %s280 = sphi 0, %s277
      %s281 = sphi 0, %s280
      %s297 = sphi 0, %s281
      %s305 = sphi 0, %s307
      %s308 = sphi 0, %s305
      %s309 = sphi 0, %s308
      %s325 = sphi 0, %s309
    $region4: #{tpu_custom_call.1} parent=1 // loop_header_branch
      %32 = sbr.rel (%p30) target = $region8
    $region5: #{tpu_custom_call.1} parent=1 // loop_body
      %s34 = ssub.s32 %s29, 1
      %s35 = ssub.s32 %s29, 2
      %s42 = sadd.s32 1, %s37
      %p43 = scmp.ge.s32.totalorder %s42, 1
      %s44 = scalar_select %p43, 0, %s42
      %s45 = sadd.s32 1, %s36
      %s46 = scalar_select %p43, %s45, %s36
      %p47 = scmp.ge.s32.totalorder %s46, 2
      %s48 = scalar_select %p47, 0, %s46
      %s49 = ssub.s32 %s36, %s48
      %s50 = ssub.s32 %s37, %s44
      %s51 = sor.u32 %s49, %s50
      %p52 = scmp.eq.s32.totalorder %s51, 0
      %s54 = sadd.s32 %s53, 1
      %s55 = scalar_select %p52, %s53, %s54
      %p58 = pneg %p52
      %p59 = scmp.eq.s32.totalorder %s29, 1
      %p60 = por %p58, %p59
      %p61 = scmp.ne.s32.totalorder %s53, %s56
      %p62 = scmp.eq.s32.totalorder %s29, 0
      %p63 = por %p61, %p62
      %p64 = scmp.ne.s32.totalorder %s53, %s56
      %p65 = scmp.eq.s32.totalorder %s34, 1
      %p66 = por %p64, %p65
      %p67 = scmp.ne.s32.totalorder %s56, %s57
      %p68 = scmp.eq.s32.totalorder %s34, 0
      %p69 = por %p67, %p68
      %p70 = scmp.ne.s32.totalorder %s56, %s57
      %p71 = scmp.eq.s32.totalorder %s35, 1
      %p72 = por %p70, %p71
      %p74 = scmp.ne.s32.totalorder %s57, %s73
      %p75 = scmp.eq.s32.totalorder %s35, 0
      %p76 = por %p74, %p75
      %s78 = sadd.s32 %s77, 1
      %p81 = scmp.eq.s32.totalorder %s29, 1
      %p82 = scmp.ne.s32.totalorder %s77, %s79
      %p83 = scmp.eq.s32.totalorder %s29, 0
      %p84 = por %p82, %p83
      %p85 = scmp.ne.s32.totalorder %s77, %s79
      %p86 = scmp.eq.s32.totalorder %s34, 1
      %p87 = por %p85, %p86
      %p88 = scmp.ne.s32.totalorder %s79, %s80
      %p89 = scmp.eq.s32.totalorder %s34, 0
      %p90 = por %p88, %p89
      %p91 = scmp.ne.s32.totalorder %s79, %s80
      %p92 = scmp.eq.s32.totalorder %s35, 1
      %p93 = por %p91, %p92
      %p95 = scmp.ne.s32.totalorder %s80, %s94
      %p96 = scmp.eq.s32.totalorder %s35, 0
      %p97 = por %p95, %p96
      %s99 = sadd.s32 %s98, 1
      %p102 = scmp.eq.s32.totalorder %s29, 1
      %p103 = scmp.ne.s32.totalorder %s98, %s100
      %p104 = scmp.eq.s32.totalorder %s29, 0
      %p105 = por %p103, %p104
      %p106 = scmp.ne.s32.totalorder %s98, %s100
      %p107 = scmp.eq.s32.totalorder %s34, 1
      %p108 = por %p106, %p107
      %p109 = scmp.ne.s32.totalorder %s100, %s101
      %p110 = scmp.eq.s32.totalorder %s34, 0
      %p111 = por %p109, %p110
      %p112 = scmp.ne.s32.totalorder %s100, %s101
      %p113 = scmp.eq.s32.totalorder %s35, 1
      %p114 = por %p112, %p113
      %p116 = scmp.ne.s32.totalorder %s101, %s115
      %p117 = scmp.eq.s32.totalorder %s35, 0
      %p118 = por %p116, %p117
      %s120 = sadd.s32 %s119, 1
      %p123 = scmp.eq.s32.totalorder %s29, 1
      %p124 = scmp.ne.s32.totalorder %s119, %s121
      %p125 = scmp.eq.s32.totalorder %s29, 0
      %p126 = por %p124, %p125
      %p127 = scmp.ne.s32.totalorder %s119, %s121
      %p128 = scmp.eq.s32.totalorder %s34, 1
      %p129 = por %p127, %p128
      %p130 = scmp.ne.s32.totalorder %s121, %s122
      %p131 = scmp.eq.s32.totalorder %s34, 0
      %p132 = por %p130, %p131
      %p133 = scmp.ne.s32.totalorder %s121, %s122
      %p134 = scmp.eq.s32.totalorder %s35, 1
      %p135 = por %p133, %p134
      %p137 = scmp.ne.s32.totalorder %s122, %s136
      %p138 = scmp.eq.s32.totalorder %s35, 0
      %p139 = por %p137, %p138
      %s141 = sadd.s32 %s140, 1
      %p144 = scmp.eq.s32.totalorder %s29, 1
      %p145 = scmp.ne.s32.totalorder %s140, %s142
      %p146 = scmp.eq.s32.totalorder %s29, 0
      %p147 = por %p145, %p146
      %p148 = scmp.ne.s32.totalorder %s140, %s142
      %p149 = scmp.eq.s32.totalorder %s34, 1
      %p150 = por %p148, %p149
      %p151 = scmp.ne.s32.totalorder %s142, %s143
      %p152 = scmp.eq.s32.totalorder %s34, 0
      %p153 = por %p151, %p152
      %p154 = scmp.ne.s32.totalorder %s142, %s143
      %p155 = scmp.eq.s32.totalorder %s35, 1
      %p156 = por %p154, %p155
      %p158 = scmp.ne.s32.totalorder %s143, %s157
      %p159 = scmp.eq.s32.totalorder %s35, 0
      %p160 = por %p158, %p159
      %s162 = sadd.s32 %s161, 1
      %p165 = scmp.eq.s32.totalorder %s29, 1
      %p166 = scmp.ne.s32.totalorder %s161, %s163
      %p167 = scmp.eq.s32.totalorder %s29, 0
      %p168 = por %p166, %p167
      %p169 = scmp.ne.s32.totalorder %s161, %s163
      %p170 = scmp.eq.s32.totalorder %s34, 1
      %p171 = por %p169, %p170
      %p172 = scmp.ne.s32.totalorder %s163, %s164
      %p173 = scmp.eq.s32.totalorder %s34, 0
      %p174 = por %p172, %p173
      %p175 = scmp.ne.s32.totalorder %s163, %s164
      %p176 = scmp.eq.s32.totalorder %s35, 1
      %p177 = por %p175, %p176
      %p179 = scmp.ne.s32.totalorder %s164, %s178
      %p180 = scmp.eq.s32.totalorder %s35, 0
      %p181 = por %p179, %p180
      %s183 = sadd.s32 %s182, 1
      %p186 = scmp.eq.s32.totalorder %s29, 1
      %p187 = scmp.ne.s32.totalorder %s182, %s184
      %p188 = scmp.eq.s32.totalorder %s29, 0
      %p189 = por %p187, %p188
      %p190 = scmp.ne.s32.totalorder %s182, %s184
      %p191 = scmp.eq.s32.totalorder %s34, 1
      %p192 = por %p190, %p191
      %p193 = scmp.ne.s32.totalorder %s184, %s185
      %p194 = scmp.eq.s32.totalorder %s34, 0
      %p195 = por %p193, %p194
      %p196 = scmp.ne.s32.totalorder %s184, %s185
      %p197 = scmp.eq.s32.totalorder %s35, 1
      %p198 = por %p196, %p197
      %p200 = scmp.ne.s32.totalorder %s185, %s199
      %p201 = scmp.eq.s32.totalorder %s35, 0
      %p202 = por %p200, %p201
      %s204 = sadd.s32 %s203, 1
      %p207 = scmp.eq.s32.totalorder %s29, 1
      %p208 = scmp.ne.s32.totalorder %s203, %s205
      %p209 = scmp.eq.s32.totalorder %s29, 0
      %p210 = por %p208, %p209
      %p211 = scmp.ne.s32.totalorder %s203, %s205
      %p212 = scmp.eq.s32.totalorder %s34, 1
      %p213 = por %p211, %p212
      %p214 = scmp.ne.s32.totalorder %s205, %s206
      %p215 = scmp.eq.s32.totalorder %s34, 0
      %p216 = por %p214, %p215
      %p217 = scmp.ne.s32.totalorder %s205, %s206
      %p218 = scmp.eq.s32.totalorder %s35, 1
      %p219 = por %p217, %p218
      %p221 = scmp.ne.s32.totalorder %s206, %s220
      %p222 = scmp.eq.s32.totalorder %s35, 0
      %p223 = por %p221, %p222
      %s225 = sadd.s32 %s224, 1
      %p228 = scmp.eq.s32.totalorder %s29, 1
      %p229 = scmp.ne.s32.totalorder %s224, %s226
      %p230 = scmp.eq.s32.totalorder %s29, 0
      %p231 = por %p229, %p230
      %p232 = scmp.ne.s32.totalorder %s224, %s226
      %p233 = scmp.eq.s32.totalorder %s34, 1
      %p234 = por %p232, %p233
      %p235 = scmp.ne.s32.totalorder %s226, %s227
      %p236 = scmp.eq.s32.totalorder %s34, 0
      %p237 = por %p235, %p236
      %p238 = scmp.ne.s32.totalorder %s226, %s227
      %p239 = scmp.eq.s32.totalorder %s35, 1
      %p240 = por %p238, %p239
      %p242 = scmp.ne.s32.totalorder %s227, %s241
      %p243 = scmp.eq.s32.totalorder %s35, 0
      %p244 = por %p242, %p243
      %s245 = ssub.s32 %s36, %s48
      %s246 = ssub.s32 %s37, %s44
      %s247 = sor.u32 %s245, %s246
      %p248 = scmp.eq.s32.totalorder %s247, 0
      %s250 = sadd.s32 %s249, 1
      %s251 = scalar_select %p248, %s249, %s250
      %p254 = pneg %p248
      %p255 = scmp.eq.s32.totalorder %s29, 1
      %p256 = por %p254, %p255
      %p257 = scmp.ne.s32.totalorder %s249, %s252
      %p258 = scmp.eq.s32.totalorder %s29, 0
      %p259 = por %p257, %p258
      %p260 = scmp.ne.s32.totalorder %s249, %s252
      %p261 = scmp.eq.s32.totalorder %s34, 1
      %p262 = por %p260, %p261
      %p263 = scmp.ne.s32.totalorder %s252, %s253
      %p264 = scmp.eq.s32.totalorder %s34, 0
      %p265 = por %p263, %p264
      %p266 = scmp.ne.s32.totalorder %s252, %s253
      %p267 = scmp.eq.s32.totalorder %s35, 1
      %p268 = por %p266, %p267
      %p270 = scmp.ne.s32.totalorder %s253, %s269
      %p271 = scmp.eq.s32.totalorder %s35, 0
      %p272 = por %p270, %p271
      %s273 = ssub.s32 %s36, %s48
      %s274 = ssub.s32 %s37, %s44
      %s275 = sor.u32 %s273, %s274
      %p276 = scmp.eq.s32.totalorder %s275, 0
      %s278 = sadd.s32 %s277, 1
      %s279 = scalar_select %p276, %s277, %s278
      %p282 = pneg %p276
      %p283 = scmp.eq.s32.totalorder %s29, 1
      %p284 = por %p282, %p283
      %p285 = scmp.ne.s32.totalorder %s277, %s280
      %p286 = scmp.eq.s32.totalorder %s29, 0
      %p287 = por %p285, %p286
      %p288 = scmp.ne.s32.totalorder %s277, %s280
      %p289 = scmp.eq.s32.totalorder %s34, 1
      %p290 = por %p288, %p289
      %p291 = scmp.ne.s32.totalorder %s280, %s281
      %p292 = scmp.eq.s32.totalorder %s34, 0
      %p293 = por %p291, %p292
      %p294 = scmp.ne.s32.totalorder %s280, %s281
      %p295 = scmp.eq.s32.totalorder %s35, 1
      %p296 = por %p294, %p295
      %p298 = scmp.ne.s32.totalorder %s281, %s297
      %p299 = scmp.eq.s32.totalorder %s35, 0
      %p300 = por %p298, %p299
      %s301 = ssub.s32 %s36, %s48
      %s302 = ssub.s32 %s37, %s44
      %s303 = sor.u32 %s301, %s302
      %p304 = scmp.eq.s32.totalorder %s303, 0
      %s306 = sadd.s32 %s305, 1
      %s307 = scalar_select %p304, %s305, %s306
      %p310 = pneg %p304
      %p311 = scmp.eq.s32.totalorder %s29, 1
      %p312 = por %p310, %p311
      %p313 = scmp.ne.s32.totalorder %s305, %s308
      %p314 = scmp.eq.s32.totalorder %s29, 0
      %p315 = por %p313, %p314
      %p316 = scmp.ne.s32.totalorder %s305, %s308
      %p317 = scmp.eq.s32.totalorder %s34, 1
      %p318 = por %p316, %p317
      %p319 = scmp.ne.s32.totalorder %s308, %s309
      %p320 = scmp.eq.s32.totalorder %s34, 0
      %p321 = por %p319, %p320
      %p322 = scmp.ne.s32.totalorder %s308, %s309
      %p323 = scmp.eq.s32.totalorder %s35, 1
      %p324 = por %p322, %p323
      %p326 = scmp.ne.s32.totalorder %s309, %s325
      %p327 = scmp.eq.s32.totalorder %s35, 0
      %p328 = por %p326, %p327
      %p329 = scmp.le.s32.totalorder 1, %s29
      %p330 = scmp.lt.s32.totalorder %s29, 3
      %p331 = pnand %p329, %p330
      %p332 = pneg %p331
      // Predicated region
      $region9: #{tpu_custom_call.1} parent=5 // pred_check
        _
      $region10: #{tpu_custom_call.1} parent=5 // pred_check_branch
        %334 = sbr.rel (%p331) target = $region12
      $region11: #{tpu_custom_call.1} parent=5 // pred_region
        %s335 = ssub.s32 %s29, 1
        // Predicated region
        $region13: #{tpu_custom_call.1} parent=11 // pred_check
          %p336 = pneg %p90
        $region14: #{tpu_custom_call.1} parent=11 // pred_check_branch
          %338 = sbr.rel (%p336) target = $region16
        $region15: #{tpu_custom_call.1} parent=11 // pred_region
          %s340 = ssub.s32 512, 512
          %341 = vsyncadd [#allocation6], %s340
          %s342 = sshll.u32 [#allocation5], 4
          %s343 = int_to_ptr.vmem [resolvable:$true] %s342
          %348 = dma.hbm_to_vmem [thread:$0]  %s1, 512, %s343, [#allocation6], 128, 128, 8
        $region16: #{tpu_custom_call.1} parent=11 // pred_fallthru
          _
        // Predicated region
        $region17: #{tpu_custom_call.1} parent=11 // pred_check
          %p349 = pneg %p111
        $region18: #{tpu_custom_call.1} parent=11 // pred_check_branch
          %351 = sbr.rel (%p349) target = $region20
        $region19: #{tpu_custom_call.1} parent=11 // pred_region
          _
        $region20: #{tpu_custom_call.1} parent=11 // pred_fallthru
          _
        // Predicated region
        $region21: #{tpu_custom_call.1} parent=11 // pred_check
          %p352 = pneg %p132
        $region22: #{tpu_custom_call.1} parent=11 // pred_check_branch
          %354 = sbr.rel (%p352) target = $region24
        $region23: #{tpu_custom_call.1} parent=11 // pred_region
          %s356 = ssub.s32 512, 512
          %357 = vsyncadd [#allocation6], %s356
          %s358 = sshll.u32 [#allocation7], 4
          %s359 = int_to_ptr.vmem [resolvable:$true] %s358
          %364 = dma.hbm_to_vmem [thread:$0]  %s3, 512, %s359, [#allocation6], 128, 128, 8
        $region24: #{tpu_custom_call.1} parent=11 // pred_fallthru
          _
        // Predicated region
        $region25: #{tpu_custom_call.1} parent=11 // pred_check
          %p365 = pneg %p153
        $region26: #{tpu_custom_call.1} parent=11 // pred_check_branch
          %367 = sbr.rel (%p365) target = $region28
        $region27: #{tpu_custom_call.1} parent=11 // pred_region
          _
        $region28: #{tpu_custom_call.1} parent=11 // pred_fallthru
          _
        // Predicated region
        $region29: #{tpu_custom_call.1} parent=11 // pred_check
          %p368 = pneg %p174
        $region30: #{tpu_custom_call.1} parent=11 // pred_check_branch
          %370 = sbr.rel (%p368) target = $region32
        $region31: #{tpu_custom_call.1} parent=11 // pred_region
          %s372 = ssub.s32 512, 512
          %373 = vsyncadd [#allocation9], %s372
          %s374 = sshll.u32 [#allocation8], 4
          %s375 = int_to_ptr.vmem [resolvable:$true] %s374
          %380 = dma.hbm_to_vmem [thread:$0]  %s5, 512, %s375, [#allocation9], 128, 128, 8
        $region32: #{tpu_custom_call.1} parent=11 // pred_fallthru
          _
        // Predicated region
        $region33: #{tpu_custom_call.1} parent=11 // pred_check
          %p381 = pneg %p195
        $region34: #{tpu_custom_call.1} parent=11 // pred_check_branch
          %383 = sbr.rel (%p381) target = $region36
        $region35: #{tpu_custom_call.1} parent=11 // pred_region
          _
        $region36: #{tpu_custom_call.1} parent=11 // pred_fallthru
          _
        // Predicated region
        $region37: #{tpu_custom_call.1} parent=11 // pred_check
          %p384 = pneg %p216
        $region38: #{tpu_custom_call.1} parent=11 // pred_check_branch
          %386 = sbr.rel (%p384) target = $region40
        $region39: #{tpu_custom_call.1} parent=11 // pred_region
          _
        $region40: #{tpu_custom_call.1} parent=11 // pred_fallthru
          _
        // Predicated region
        $region41: #{tpu_custom_call.1} parent=11 // pred_check
          %p387 = pneg %p237
        $region42: #{tpu_custom_call.1} parent=11 // pred_check_branch
          %389 = sbr.rel (%p387) target = $region44
        $region43: #{tpu_custom_call.1} parent=11 // pred_region
          _
        $region44: #{tpu_custom_call.1} parent=11 // pred_fallthru
          _
      $region12: #{tpu_custom_call.1} parent=5 // pred_fallthru
        _
      %p390 = scmp.lt.s32.totalorder %s29, 2
      // Predicated region
      $region45: #{tpu_custom_call.1} parent=5 // pred_check
        %p391 = pneg %p390
      $region46: #{tpu_custom_call.1} parent=5 // pred_check_branch
        %393 = sbr.rel (%p391) target = $region48
      $region47: #{tpu_custom_call.1} parent=5 // pred_region
        // Predicated region
        $region49: #{tpu_custom_call.1} parent=47 // pred_check
          %p394 = pneg %p63
        $region50: #{tpu_custom_call.1} parent=47 // pred_check_branch
          %396 = sbr.rel (%p394) target = $region52
        $region51: #{tpu_custom_call.1} parent=47 // pred_region
          %s397 = sand.u32 %s53, 1
          %s398 = scalar_lea.sflag [#allocation3], %s397
          %s399 = sand.u32 %s53, 1
          %s400 = smul.addr %s399, 8
          %s401 = scalar_lea.vmem [#allocation2], %s400
          %s403 = ssub.s32 128, 128
          %404 = vsyncadd %s398, %s403
          %s405 = sadd.s32 %s37, %s36
          %s406 = smul.addr %s405, 128
          %s407 = scalar_lea.hbm %s0, %s406
          %s409 = sshll.u32 %s401, 4
          %s410 = int_to_ptr.vmem [resolvable:$true] %s409
          %412 = dma.hbm_to_vmem [thread:$0]  %s407, 128, %s410, %s398
        $region52: #{tpu_custom_call.1} parent=47 // pred_fallthru
          _
      $region48: #{tpu_custom_call.1} parent=5 // pred_fallthru
        _
      %p413 = scmp.le.s32.totalorder 1, %s29
      %p414 = scmp.lt.s32.totalorder %s29, 3
      %p415 = pnand %p413, %p414
      %p416 = pneg %p415
      // Predicated region
      $region53: #{tpu_custom_call.1} parent=5 // pred_check
        _
      $region54: #{tpu_custom_call.1} parent=5 // pred_check_branch
        %418 = sbr.rel (%p415) target = $region56
      $region55: #{tpu_custom_call.1} parent=5 // pred_region
        %s419 = ssub.s32 %s29, 1
        %s420 = sand.u32 %s56, 1
        %s421 = scalar_lea.sflag [#allocation3], %s420
        %s422 = sand.u32 %s56, 1
        %s423 = smul.addr %s422, 8
        %s424 = scalar_lea.vmem [#allocation2], %s423
        // Predicated region
        $region57: #{tpu_custom_call.1} parent=55 // pred_check
          %p425 = pneg %p69
        $region58: #{tpu_custom_call.1} parent=55 // pred_check_branch
          %427 = sbr.rel (%p425) target = $region60
        $region59: #{tpu_custom_call.1} parent=55 // pred_region
          %428 = dma.done %s421, 128
        $region60: #{tpu_custom_call.1} parent=55 // pred_fallthru
          _
        // Predicated region
        $region61: #{tpu_custom_call.1} parent=55 // pred_check
          %p429 = pneg %p90
        $region62: #{tpu_custom_call.1} parent=55 // pred_check_branch
          %431 = sbr.rel (%p429) target = $region64
        $region63: #{tpu_custom_call.1} parent=55 // pred_region
          %432 = dma.done [#allocation6], 512
        $region64: #{tpu_custom_call.1} parent=55 // pred_fallthru
          _
        // Predicated region
        $region65: #{tpu_custom_call.1} parent=55 // pred_check
          %p433 = pneg %p132
        $region66: #{tpu_custom_call.1} parent=55 // pred_check_branch
          %435 = sbr.rel (%p433) target = $region68
        $region67: #{tpu_custom_call.1} parent=55 // pred_region
          %436 = dma.done [#allocation6], 512
        $region68: #{tpu_custom_call.1} parent=55 // pred_fallthru
          _
        // Predicated region
        $region69: #{tpu_custom_call.1} parent=55 // pred_check
          %p437 = pneg %p174
        $region70: #{tpu_custom_call.1} parent=55 // pred_check_branch
          %439 = sbr.rel (%p437) target = $region72
        $region71: #{tpu_custom_call.1} parent=55 // pred_region
          %440 = dma.done [#allocation9], 512
        $region72: #{tpu_custom_call.1} parent=55 // pred_fallthru
          _
        %s441 = sand.u32 %s56, 1
        %s442 = scalar_lea.sflag [#allocation3], %s441
        %s443 = sand.u32 %s56, 1
        %s444 = smul.addr %s443, 8
        %s445 = scalar_lea.vmem [#allocation2], %s444
        %p446 = pneg %p69
        %p447 = pneg %p66
        %p448 = pneg %p90
        %p449 = pneg %p87
        %p450 = pneg %p111
        %p451 = pneg %p108
        %p452 = pneg %p132
        %p453 = pneg %p129
        %p454 = pneg %p153
        %p455 = pneg %p150
        %p456 = pneg %p174
        %p457 = pneg %p171
        %p458 = pneg %p195
        %p459 = pneg %p192
        %p460 = pneg %p216
        %p461 = pneg %p213
        %p462 = pneg %p237
        %p463 = pneg %p234
        %p464 = pneg %p265
        %p465 = pneg %p262
        %s466 = sand.u32 %s252, 1
        %s467 = scalar_lea.sflag [#allocation4], %s466
        %s468 = sand.u32 %s252, 1
        %s469 = smul.addr %s468, 32
        %s470 = scalar_lea.vmem [#allocation10], %s469
        %p471 = pneg %p293
        %p472 = pneg %p290
        %s473 = sand.u32 %s34, 1
        %s474 = scalar_lea.sflag [#allocation12], %s473
        %s475 = sand.u32 %s280, 1
        %s476 = smul.addr %s475, 32
        %s477 = scalar_lea.vmem [#allocation11], %s476
        %p478 = pneg %p321
        %p479 = pneg %p318
        %s480 = sand.u32 %s34, 1
        %s481 = scalar_lea.sflag [#allocation12], %s480
        %s482 = sand.u32 %s308, 1
        %s483 = smul.addr %s482, 32
        %s484 = scalar_lea.vmem [#allocation13], %s483
        %v485 = vld [vmem:[%s424] sm:$0xff]
        %v486 = vld [vmem:[%s7] sm:$0x1]
        %v487 = vld [vmem:[%s8] sm:$0x1]
        %vm488 = vcmask 261120
        %v489 = vsel %vm488, %v485, 0.0
        %490 = vadd.xlane.f32.xlu0 %v489
        %v491 = vpop.xlane.xlu0 %490
        %v492 = vrcp.pop 32.0
        %v493 = vmul.f32 %v491, %v492
        %v494 = vsub.f32 %v485, %v493
        %v495 = vmul.f32 %v494, %v494
        %v496 = vsel %vm488, %v495, 0.0
        %497 = vadd.xlane.f32.xlu0 %v496
        %v498 = vpop.xlane.xlu0 %497
        %v499 = vrcp.pop 31.0
        %v500 = vmul.f32 %v498, %v499
        %v501 = vrsqrt.pop %v500
        %v502 = vmul.f32 %v500, %v501
        %vm503 = vcmp.eq.f32.partialorder %v500, inf
        %v504 = vsel %vm503, %v500, %v502
        %vm505 = vcmp.eq.f32.partialorder %v500, 0.0
        %v506 = vand.u32 %v500, 2147483648
        %v507 = vsel %vm505, %v506, %v504
        %v508 = vadd.f32 %v507, 1e-06
        %v509 = vrcp.pop %v508
        %v511 = vlaneseq
        %v512 = vshrl.u32 %v511, 7
        %v513 = vsub.s32 0, %v512
        %v514 = vrot.slane %v486, %v513
        %v516 = vmul.f32 %v514, %v494
        %v517 = vmul.f32 %v516, %v509
        %v519 = vlaneseq
        %v520 = vshrl.u32 %v519, 7
        %v521 = vsub.s32 0, %v520
        %v522 = vrot.slane %v487, %v521
        %v524 = vadd.f32 %v517, %v522
        %v525 = vld [vmem:[#allocation5] sm:$0xff]
        %v526 = vld [vmem:[#allocation5 + $0x8] sm:$0xff]
        %v527 = vld [vmem:[#allocation5 + $0x10] sm:$0xff]
        %v528 = vld [vmem:[#allocation5 + $0x18] sm:$0xff]
        %v529 = vld [vmem:[%s2] sm:$0x1]
        %v531 = vlaneseq
        %v532 = vshrl.u32 %v531, 7
        %v533 = vsub.s32 0, %v532
        %v534 = vrot.slane %v529, %v533
        %v537 = vsel %vm488, %v524, 0
        %539 = vmatprep.subr.mxu0 0.0
        %540 = vmatpush1.msra.mxu0 %v525
        %541 = vmatprep.subr.mxu0 0.0
        %542 = vmatpush1.msra.mxu0 %v526
        %543 = vmatprep.subr.mxu0 0.0
        %544 = vmatpush1.msra.mxu0 %v527
        %545 = vmatprep.subr.mxu0 0.0
        %546 = vmatpush1.msra.mxu0 %v528
        %547 = vmatprep.subr.mxu0 0.0
        %548 = vmatpush1.msra.mxu0 0.0
        %549 = vmatprep.subr.mxu0 0.0
        %550 = vmatpush1.msra.mxu0 0.0
        %551 = vmatprep.subr.mxu0 0.0
        %552 = vmatpush1.msra.mxu0 0.0
        %553 = vmatprep.subr.mxu0 0.0
        %554 = vmatpush1.msra.mxu0 0.0
        %555 = vmatprep.subr.mxu0 0.0
        %556 = vmatpush1.msra.mxu0 0.0
        %557 = vmatprep.subr.mxu0 0.0
        %558 = vmatpush1.msra.mxu0 0.0
        %559 = vmatprep.subr.mxu0 0.0
        %560 = vmatpush1.msra.mxu0 0.0
        %561 = vmatprep.subr.mxu0 0.0
        %562 = vmatpush1.msra.mxu0 0.0
        %563 = vmatprep.subr.mxu0 0.0
        %564 = vmatpush1.msra.mxu0 0.0
        %565 = vmatprep.subr.mxu0 0.0
        %566 = vmatpush1.msra.mxu0 0.0
        %567 = vmatprep.subr.mxu0 0.0
        %568 = vmatpush1.msra.mxu0 0.0
        %569 = vmatprep.subr.mxu0 0.0
        %570 = vmatpush1.msra.mxu0 0.0
        %571 = vmatprep.subr.mxu0 0.0
        %572 = vmatpush1.msra.mxu0 0.0
        %573 = vmatprep.subr.mxu0 0.0
        %574 = vmatpush1.msra.mxu0 0.0
        %575 = vmatprep.subr.mxu0 0.0
        %576 = vmatpush1.msra.mxu0 0.0
        %577 = vmatprep.subr.mxu0 0.0
        %578 = vmatpush1.msra.mxu0 0.0
        %579 = vmatprep.subr.mxu0 0.0
        %580 = vmatpush1.msra.mxu0 0.0
        %581 = vmatprep.subr.mxu0 0.0
        %582 = vmatpush1.msra.mxu0 0.0
        %583 = vmatprep.subr.mxu0 0.0
        %584 = vmatpush1.msra.mxu0 0.0
        %585 = vmatprep.subr.mxu0 0.0
        %586 = vmatpush1.msra.mxu0 0.0
        %587 = vmatprep.subr.mxu0 0.0
        %588 = vmatpush1.msra.mxu0 0.0
        %589 = vmatprep.subr.mxu0 0.0
        %590 = vmatpush1.msra.mxu0 0.0
        %591 = vmatprep.subr.mxu0 0.0
        %592 = vmatpush1.msra.mxu0 0.0
        %593 = vmatprep.subr.mxu0 0.0
        %594 = vmatpush1.msra.mxu0 0.0
        %595 = vmatprep.subr.mxu0 0.0
        %596 = vmatpush1.msra.mxu0 0.0
        %597 = vmatprep.subr.mxu0 0.0
        %598 = vmatpush1.msra.mxu0 0.0
        %599 = vmatprep.subr.mxu0 0.0
        %600 = vmatpush1.msra.mxu0 0.0
        %601 = vmatprep.subr.mxu0 0.0
        %602 = vmatpush1.msra.mxu0 0.0
        %603 = vmatprep.mubr.f32.mxu0 0.0
        %604 = vmatmul.mubr.f32.gmra.mrb[0].mxu0 %v537
        %v605 = vpop.f32.mrb[0].mxu0
        %v606 = vadd.f32 %v534, %v605
        %v607 = vpop.f32.mrb[0].mxu0
        %608 = vdwg.mxu0
        %v609 = vld [vmem:[#allocation7] sm:$0xff]
        %v610 = vld [vmem:[#allocation7 + $0x8] sm:$0xff]
        %v611 = vld [vmem:[#allocation7 + $0x10] sm:$0xff]
        %v612 = vld [vmem:[#allocation7 + $0x18] sm:$0xff]
        %v613 = vld [vmem:[%s4] sm:$0x1]
        %v615 = vlaneseq
        %v616 = vshrl.u32 %v615, 7
        %v617 = vsub.s32 0, %v616
        %v618 = vrot.slane %v613, %v617
        %620 = vmatprep.subr.mxu0 0.0
        %621 = vmatpush1.msra.mxu0 %v609
        %622 = vmatprep.subr.mxu0 0.0
        %623 = vmatpush1.msra.mxu0 %v610
        %624 = vmatprep.subr.mxu0 0.0
        %625 = vmatpush1.msra.mxu0 %v611
        %626 = vmatprep.subr.mxu0 0.0
        %627 = vmatpush1.msra.mxu0 %v612
        %628 = vmatprep.subr.mxu0 0.0
        %629 = vmatpush1.msra.mxu0 0.0
        %630 = vmatprep.subr.mxu0 0.0
        %631 = vmatpush1.msra.mxu0 0.0
        %632 = vmatprep.subr.mxu0 0.0
        %633 = vmatpush1.msra.mxu0 0.0
        %634 = vmatprep.subr.mxu0 0.0
        %635 = vmatpush1.msra.mxu0 0.0
        %636 = vmatprep.subr.mxu0 0.0
        %637 = vmatpush1.msra.mxu0 0.0
        %638 = vmatprep.subr.mxu0 0.0
        %639 = vmatpush1.msra.mxu0 0.0
        %640 = vmatprep.subr.mxu0 0.0
        %641 = vmatpush1.msra.mxu0 0.0
        %642 = vmatprep.subr.mxu0 0.0
        %643 = vmatpush1.msra.mxu0 0.0
        %644 = vmatprep.subr.mxu0 0.0
        %645 = vmatpush1.msra.mxu0 0.0
        %646 = vmatprep.subr.mxu0 0.0
        %647 = vmatpush1.msra.mxu0 0.0
        %648 = vmatprep.subr.mxu0 0.0
        %649 = vmatpush1.msra.mxu0 0.0
        %650 = vmatprep.subr.mxu0 0.0
        %651 = vmatpush1.msra.mxu0 0.0
        %652 = vmatprep.subr.mxu0 0.0
        %653 = vmatpush1.msra.mxu0 0.0
        %654 = vmatprep.subr.mxu0 0.0
        %655 = vmatpush1.msra.mxu0 0.0
        %656 = vmatprep.subr.mxu0 0.0
        %657 = vmatpush1.msra.mxu0 0.0
        %658 = vmatprep.subr.mxu0 0.0
        %659 = vmatpush1.msra.mxu0 0.0
        %660 = vmatprep.subr.mxu0 0.0
        %661 = vmatpush1.msra.mxu0 0.0
        %662 = vmatprep.subr.mxu0 0.0
        %663 = vmatpush1.msra.mxu0 0.0
        %664 = vmatprep.subr.mxu0 0.0
        %665 = vmatpush1.msra.mxu0 0.0
        %666 = vmatprep.subr.mxu0 0.0
        %667 = vmatpush1.msra.mxu0 0.0
        %668 = vmatprep.subr.mxu0 0.0
        %669 = vmatpush1.msra.mxu0 0.0
        %670 = vmatprep.subr.mxu0 0.0
        %671 = vmatpush1.msra.mxu0 0.0
        %672 = vmatprep.subr.mxu0 0.0
        %673 = vmatpush1.msra.mxu0 0.0
        %674 = vmatprep.subr.mxu0 0.0
        %675 = vmatpush1.msra.mxu0 0.0
        %676 = vmatprep.subr.mxu0 0.0
        %677 = vmatpush1.msra.mxu0 0.0
        %678 = vmatprep.subr.mxu0 0.0
        %679 = vmatpush1.msra.mxu0 0.0
        %680 = vmatprep.subr.mxu0 0.0
        %681 = vmatpush1.msra.mxu0 0.0
        %682 = vmatprep.subr.mxu0 0.0
        %683 = vmatpush1.msra.mxu0 0.0
        %684 = vmatprep.mubr.f32.mxu0 0.0
        %685 = vmatmul.mubr.f32.gmra.mrb[0].mxu0 %v537
        %v686 = vpop.f32.mrb[0].mxu0
        %v687 = vadd.f32 %v618, %v686
        %v688 = vpop.f32.mrb[0].mxu0
        %689 = vdwg.mxu0
        %v690 = vld [vmem:[#allocation8] sm:$0xff]
        %v691 = vld [vmem:[#allocation8 + $0x8] sm:$0xff]
        %v692 = vld [vmem:[#allocation8 + $0x10] sm:$0xff]
        %v693 = vld [vmem:[#allocation8 + $0x18] sm:$0xff]
        %v694 = vld [vmem:[%s6] sm:$0x1]
        %v696 = vlaneseq
        %v697 = vshrl.u32 %v696, 7
        %v698 = vsub.s32 0, %v697
        %v699 = vrot.slane %v694, %v698
        %701 = vmatprep.subr.mxu0 0.0
        %702 = vmatpush1.msra.mxu0 %v690
        %703 = vmatprep.subr.mxu0 0.0
        %704 = vmatpush1.msra.mxu0 %v691
        %705 = vmatprep.subr.mxu0 0.0
        %706 = vmatpush1.msra.mxu0 %v692
        %707 = vmatprep.subr.mxu0 0.0
        %708 = vmatpush1.msra.mxu0 %v693
        %709 = vmatprep.subr.mxu0 0.0
        %710 = vmatpush1.msra.mxu0 0.0
        %711 = vmatprep.subr.mxu0 0.0
        %712 = vmatpush1.msra.mxu0 0.0
        %713 = vmatprep.subr.mxu0 0.0
        %714 = vmatpush1.msra.mxu0 0.0
        %715 = vmatprep.subr.mxu0 0.0
        %716 = vmatpush1.msra.mxu0 0.0
        %717 = vmatprep.subr.mxu0 0.0
        %718 = vmatpush1.msra.mxu0 0.0
        %719 = vmatprep.subr.mxu0 0.0
        %720 = vmatpush1.msra.mxu0 0.0
        %721 = vmatprep.subr.mxu0 0.0
        %722 = vmatpush1.msra.mxu0 0.0
        %723 = vmatprep.subr.mxu0 0.0
        %724 = vmatpush1.msra.mxu0 0.0
        %725 = vmatprep.subr.mxu0 0.0
        %726 = vmatpush1.msra.mxu0 0.0
        %727 = vmatprep.subr.mxu0 0.0
        %728 = vmatpush1.msra.mxu0 0.0
        %729 = vmatprep.subr.mxu0 0.0
        %730 = vmatpush1.msra.mxu0 0.0
        %731 = vmatprep.subr.mxu0 0.0
        %732 = vmatpush1.msra.mxu0 0.0
        %733 = vmatprep.subr.mxu0 0.0
        %734 = vmatpush1.msra.mxu0 0.0
        %735 = vmatprep.subr.mxu0 0.0
        %736 = vmatpush1.msra.mxu0 0.0
        %737 = vmatprep.subr.mxu0 0.0
        %738 = vmatpush1.msra.mxu0 0.0
        %739 = vmatprep.subr.mxu0 0.0
        %740 = vmatpush1.msra.mxu0 0.0
        %741 = vmatprep.subr.mxu0 0.0
        %742 = vmatpush1.msra.mxu0 0.0
        %743 = vmatprep.subr.mxu0 0.0
        %744 = vmatpush1.msra.mxu0 0.0
        %745 = vmatprep.subr.mxu0 0.0
        %746 = vmatpush1.msra.mxu0 0.0
        %747 = vmatprep.subr.mxu0 0.0
        %748 = vmatpush1.msra.mxu0 0.0
        %749 = vmatprep.subr.mxu0 0.0
        %750 = vmatpush1.msra.mxu0 0.0
        %751 = vmatprep.subr.mxu0 0.0
        %752 = vmatpush1.msra.mxu0 0.0
        %753 = vmatprep.subr.mxu0 0.0
        %754 = vmatpush1.msra.mxu0 0.0
        %755 = vmatprep.subr.mxu0 0.0
        %756 = vmatpush1.msra.mxu0 0.0
        %757 = vmatprep.subr.mxu0 0.0
        %758 = vmatpush1.msra.mxu0 0.0
        %759 = vmatprep.subr.mxu0 0.0
        %760 = vmatpush1.msra.mxu0 0.0
        %761 = vmatprep.subr.mxu0 0.0
        %762 = vmatpush1.msra.mxu0 0.0
        %763 = vmatprep.subr.mxu0 0.0
        %764 = vmatpush1.msra.mxu0 0.0
        %765 = vmatprep.mubr.f32.mxu0 0.0
        %766 = vmatmul.mubr.f32.gmra.mrb[0].mxu0 %v537
        %v767 = vpop.f32.mrb[0].mxu0
        %v768 = vadd.f32 %v699, %v767
        %v769 = vpop.f32.mrb[0].mxu0
        %770 = vdwg.mxu0
        %vm771 = vcmask 64512
        %772 = vst.msk [vmem:[%s470] sm:$0xff] %vm771, %v606
        %773 = vst.msk [vmem:[%s477] sm:$0xff] %vm771, %v687
        %774 = vst.msk [vmem:[%s484] sm:$0xff] %vm771, %v768
        %776 = vrot.lane.b32.xlu0 %v606, 120
        %v777 = vpop.permute.xlu0 %776
        %s779 = scalar_lea.vmem %s470, 8 [#allocation10]
        %780 = vst.msk [vmem:[%s779] sm:$0xff] %vm771, %v777
        %782 = vrot.lane.b32.xlu0 %v687, 120
        %v783 = vpop.permute.xlu0 %782
        %s785 = scalar_lea.vmem %s477, 8 [#allocation11]
        %786 = vst.msk [vmem:[%s785] sm:$0xff] %vm771, %v783
        %788 = vrot.lane.b32.xlu0 %v768, 120
        %v789 = vpop.permute.xlu0 %788
        %s791 = scalar_lea.vmem %s484, 8 [#allocation13]
        %792 = vst.msk [vmem:[%s791] sm:$0xff] %vm771, %v789
        %793 = vrot.lane.b32.xlu0 %v606, 112
        %v794 = vpop.permute.xlu0 %793
        %s796 = scalar_lea.vmem %s470, 16 [#allocation10]
        %797 = vst.msk [vmem:[%s796] sm:$0xff] %vm771, %v794
        %798 = vrot.lane.b32.xlu0 %v687, 112
        %v799 = vpop.permute.xlu0 %798
        %s801 = scalar_lea.vmem %s477, 16 [#allocation11]
        %802 = vst.msk [vmem:[%s801] sm:$0xff] %vm771, %v799
        %803 = vrot.lane.b32.xlu0 %v768, 112
        %v804 = vpop.permute.xlu0 %803
        %s806 = scalar_lea.vmem %s484, 16 [#allocation13]
        %807 = vst.msk [vmem:[%s806] sm:$0xff] %vm771, %v804
        %808 = vrot.lane.b32.xlu0 %v606, 104
        %v809 = vpop.permute.xlu0 %808
        %s811 = scalar_lea.vmem %s470, 24 [#allocation10]
        %812 = vst.msk [vmem:[%s811] sm:$0xff] %vm771, %v809
        %813 = vrot.lane.b32.xlu0 %v687, 104
        %v814 = vpop.permute.xlu0 %813
        %s816 = scalar_lea.vmem %s477, 24 [#allocation11]
        %817 = vst.msk [vmem:[%s816] sm:$0xff] %vm771, %v814
        %818 = vrot.lane.b32.xlu0 %v768, 104
        %v819 = vpop.permute.xlu0 %818
        %s821 = scalar_lea.vmem %s484, 24 [#allocation13]
        %822 = vst.msk [vmem:[%s821] sm:$0xff] %vm771, %v819
        %s823 = sand.u32 %s252, 1
        %s824 = scalar_lea.sflag [#allocation4], %s823
        %s825 = sand.u32 %s252, 1
        %s826 = smul.addr %s825, 32
        %s827 = scalar_lea.vmem [#allocation10], %s826
        %s828 = sand.u32 %s34, 1
        %s829 = scalar_lea.sflag [#allocation12], %s828
        %s830 = sand.u32 %s280, 1
        %s831 = smul.addr %s830, 32
        %s832 = scalar_lea.vmem [#allocation11], %s831
        %s833 = sand.u32 %s34, 1
        %s834 = scalar_lea.sflag [#allocation12], %s833
        %s835 = sand.u32 %s308, 1
        %s836 = smul.addr %s835, 32
        %s837 = scalar_lea.vmem [#allocation13], %s836
        // Predicated region
        $region73: #{tpu_custom_call.1} parent=55 // pred_check
          %p838 = pneg %p262
        $region74: #{tpu_custom_call.1} parent=55 // pred_check_branch
          %840 = sbr.rel (%p838) target = $region76
        $region75: #{tpu_custom_call.1} parent=55 // pred_region
          %s842 = ssub.s32 512, 512
          %843 = vsyncadd %s824, %s842
          %s844 = smul.addr %s38, 4
          %s845 = sadd.s32 %s39, %s844
          %s846 = smul.addr %s845, 128
          %s847 = scalar_lea.hbm %s9, %s846
          %s848 = sshll.u32 %s827, 4
          %s849 = int_to_ptr.vmem [resolvable:$true] %s848
          %854 = dma.vmem_to_hbm [thread:$0]  %s849, 512, %s847, %s824, 128, 128, 8
        $region76: #{tpu_custom_call.1} parent=55 // pred_fallthru
          _
        // Predicated region
        $region77: #{tpu_custom_call.1} parent=55 // pred_check
          %p855 = pneg %p290
        $region78: #{tpu_custom_call.1} parent=55 // pred_check_branch
          %857 = sbr.rel (%p855) target = $region80
        $region79: #{tpu_custom_call.1} parent=55 // pred_region
          %s859 = ssub.s32 512, 512
          %860 = vsyncadd %s829, %s859
          %s861 = smul.addr %s38, 4
          %s862 = sadd.s32 %s39, %s861
          %s863 = smul.addr %s862, 128
          %s864 = scalar_lea.hbm %s10, %s863
          %s865 = sshll.u32 %s832, 4
          %s866 = int_to_ptr.vmem [resolvable:$true] %s865
          %871 = dma.vmem_to_hbm [thread:$0]  %s866, 512, %s864, %s829, 128, 128, 8
        $region80: #{tpu_custom_call.1} parent=55 // pred_fallthru
          _
        // Predicated region
        $region81: #{tpu_custom_call.1} parent=55 // pred_check
          %p872 = pneg %p318
        $region82: #{tpu_custom_call.1} parent=55 // pred_check_branch
          %874 = sbr.rel (%p872) target = $region84
        $region83: #{tpu_custom_call.1} parent=55 // pred_region
          %s876 = ssub.s32 512, 512
          %877 = vsyncadd %s834, %s876
          %s878 = smul.addr %s38, 4
          %s879 = sadd.s32 %s39, %s878
          %s880 = smul.addr %s879, 128
          %s881 = scalar_lea.hbm %s11, %s880
          %s882 = sshll.u32 %s837, 4
          %s883 = int_to_ptr.vmem [resolvable:$true] %s882
          %888 = dma.vmem_to_hbm [thread:$0]  %s883, 512, %s881, %s834, 128, 128, 8
        $region84: #{tpu_custom_call.1} parent=55 // pred_fallthru
          _
      $region56: #{tpu_custom_call.1} parent=5 // pred_fallthru
        _
      %p889 = scmp.le.s32.totalorder 2, %s29
      // Predicated region
      $region85: #{tpu_custom_call.1} parent=5 // pred_check
        %p890 = pneg %p889
      $region86: #{tpu_custom_call.1} parent=5 // pred_check_branch
        %892 = sbr.rel (%p890) target = $region88
      $region87: #{tpu_custom_call.1} parent=5 // pred_region
        %s893 = ssub.s32 %s29, 2
        // Predicated region
        $region89: #{tpu_custom_call.1} parent=87 // pred_check
          %p894 = pneg %p268
        $region90: #{tpu_custom_call.1} parent=87 // pred_check_branch
          %896 = sbr.rel (%p894) target = $region92
        $region91: #{tpu_custom_call.1} parent=87 // pred_region
          %s897 = sand.u32 %s253, 1
          %s898 = scalar_lea.sflag [#allocation4], %s897
          %s899 = sand.u32 %s253, 1
          %s900 = smul.addr %s899, 32
          %s901 = scalar_lea.vmem [#allocation10], %s900
          %902 = dma.done %s898, 512
        $region92: #{tpu_custom_call.1} parent=87 // pred_fallthru
          _
        // Predicated region
        $region93: #{tpu_custom_call.1} parent=87 // pred_check
          %p903 = pneg %p296
        $region94: #{tpu_custom_call.1} parent=87 // pred_check_branch
          %905 = sbr.rel (%p903) target = $region96
        $region95: #{tpu_custom_call.1} parent=87 // pred_region
          %s906 = sand.u32 %s35, 1
          %s907 = scalar_lea.sflag [#allocation12], %s906
          %s908 = sand.u32 %s281, 1
          %s909 = smul.addr %s908, 32
          %s910 = scalar_lea.vmem [#allocation11], %s909
          %911 = dma.done %s907, 512
        $region96: #{tpu_custom_call.1} parent=87 // pred_fallthru
          _
        // Predicated region
        $region97: #{tpu_custom_call.1} parent=87 // pred_check
          %p912 = pneg %p324
        $region98: #{tpu_custom_call.1} parent=87 // pred_check_branch
          %914 = sbr.rel (%p912) target = $region100
        $region99: #{tpu_custom_call.1} parent=87 // pred_region
          %s915 = sand.u32 %s35, 1
          %s916 = scalar_lea.sflag [#allocation12], %s915
          %s917 = sand.u32 %s309, 1
          %s918 = smul.addr %s917, 32
          %s919 = scalar_lea.vmem [#allocation13], %s918
          %920 = dma.done %s916, 512
        $region100: #{tpu_custom_call.1} parent=87 // pred_fallthru
          _
      $region88: #{tpu_custom_call.1} parent=5 // pred_fallthru
        _
    $region6: #{tpu_custom_call.1} parent=1 // loop_footer
      %s33 = sadd.s32 1, %s29
    $region7: #{tpu_custom_call.1} parent=1 // loop_footer_branch
      %28 = sbr.rel target = $region3
    $region8: #{tpu_custom_call.1} parent=1 // loop_exit
      _
    %921 = vsyncpa [#allocation3], 1
    %s922 = scalar_lea.sflag [#allocation3], 1
    %923 = vsyncpa %s922, 1
    %924 = vsyncpa [#allocation6], 1
    %925 = vsyncpa [#allocation9], 1
    %926 = vsyncpa [#allocation4], 1
    %s927 = scalar_lea.sflag [#allocation4], 1
    %928 = vsyncpa %s927, 1
    %929 = vsyncpa [#allocation12], 1
    %s930 = scalar_lea.sflag [#allocation12], 1
    %931 = vsyncpa %s930, 1

</llo_original>
